<compile_context>
chip_gen: v6e
topology: v6e:2x2x1
jax: 0.10.0
libtpu: 0.0.40
codegen_flags: <defaults>
</compile_context>

<pallas_src>
import functools

import jax
import jax.numpy as jnp
from jax import lax
from jax.experimental import pallas as pl
from jax.experimental.pallas import tpu as pltpu


def _round_up(x, m):
    return (x + m - 1) // m * m


@functools.lru_cache(maxsize=None)
def _tpu_generation():
    """Best-effort TPU generation (5, 6 or 7); only used for tile shaping."""
    try:
        kind = jax.devices()[0].device_kind.lower()
    except Exception:
        return 6
    if "v7" in kind or "7x" in kind:
        return 7
    if "v6" in kind:
        return 6
    if "v5" in kind:
        return 5
    return 6


def _largest_tile(m, cap):
    """Largest multiple of 8 that divides m (m itself a multiple of 8) and is <= cap."""
    t = max(8, (min(cap, m) // 8) * 8)
    while t > 8 and m % t:
        t -= 8
    return t


def _choose_tiles(mp, np_, gen):
    """Pick (tm, tn) per chip generation.  mp is a multiple of 8, np_ a multiple of 128."""
    # N tile: fill the 256-lane MXU on v6e (single TC); on v7x only when it keeps >=2 N tiles.
    if np_ % 256 == 0 and (gen == 6 or (gen >= 7 and np_ >= 512)):
        tn = 256
    else:
        tn = min(np_, 128)
    # M tile: a divisor of mp (no row padding); bigger tiles on single-TC chips.
    cap = 512 if gen >= 7 else 1024
    tm = _largest_tile(mp, cap)
    if gen >= 7:
        # Guarantee >= 2 grid tiles so both TensorCores get work.
        while (mp // tm) * (np_ // tn) < 2 and tm > 8:
            tm = _largest_tile(mp, tm // 2)
        if (mp // tm) * (np_ // tn) < 2 and tn > 128:
            tn = 128
    return tm, tn


# ---------------------------------------------------------------------------
# Pallas kernel 1: conv-as-matmul with fused bias, optional residual branch
# (either a plain add or a fused 1x1 downsample matmul), ReLU, bf16 store.
# Full contraction (single K block) per grid step -> no accumulator / k axis.
# ---------------------------------------------------------------------------
def _conv_matmul_kernel(a_ref, w_ref, bias_ref, *rest, relu, shortcut_mode):
    acc = jnp.dot(a_ref[...], w_ref[...], preferred_element_type=jnp.float32)
    acc = acc + bias_ref[...]
    if shortcut_mode == "add":
        s_ref, o_ref = rest
        acc = acc + s_ref[...].astype(jnp.float32)          # f32 residual add
    elif shortcut_mode == "proj":
        sx_ref, sw_ref, sb_ref, o_ref = rest                  # fused 1x1 downsample
        acc = (acc
               + jnp.dot(sx_ref[...], sw_ref[...], preferred_element_type=jnp.float32)
               + sb_ref[...])
    else:
        (o_ref,) = rest
    if relu:
        acc = jnp.maximum(acc, 0.0)
    o_ref[...] = acc.astype(o_ref.dtype)


def pallas_conv_matmul(a, wm, bias, n_out, *, relu=False, shortcut=None,
                       shortcut_proj=None):
    """out = relu?(a @ wm + bias [+ shortcut | + sx @ sw + sb])[:, :n_out]  (bf16 output).

    a:             (M, K)   bf16 im2col patches (unpadded).
    wm:            (Kp, Np) bf16 weight matrix, pre-padded at init (Kp mult of 16, Np of 128).
    bias:          (1, Np)  f32 bias, pre-padded at init.
    shortcut:      (M, n_out) bf16 residual branch, or None.
    shortcut_proj: (sx (M, Ck) bf16, sw (Ck, Np) bf16, sb (1, Np) f32) fused downsample, or None.
    """
    M, K = a.shape
    Kp, Np = wm.shape
    gen = _tpu_generation()
    Mp = _round_up(M, 8)
    tm, tn = _choose_tiles(Mp, Np, gen)

    if (Mp, Kp) != (M, K):
        a = jnp.pad(a, ((0, Mp - M), (0, Kp - K)))

    args = [a, wm, bias]
    in_specs = [
        pl.BlockSpec((tm, Kp), lambda i, j: (i, 0)),
        pl.BlockSpec((Kp, tn), lambda i, j: (0, j)),
        pl.BlockSpec((1, tn), lambda i, j: (0, j)),
    ]
    if shortcut is not None:
        shortcut_mode = "add"
        s = shortcut.astype(jnp.bfloat16)
        if s.shape != (Mp, Np):
            s = jnp.pad(s, ((0, Mp - s.shape[0]), (0, Np - s.shape[1])))
        args.append(s)
        in_specs.append(pl.BlockSpec((tm, tn), lambda i, j: (i, j)))
    elif shortcut_proj is not None:
        shortcut_mode = "proj"
        sx, sw, sb = shortcut_proj
        Ck = sw.shape[0]
        sx = sx.astype(jnp.bfloat16)
        if sx.shape != (Mp, Ck):
            sx = jnp.pad(sx, ((0, Mp - sx.shape[0]), (0, Ck - sx.shape[1])))
        args.extend([sx, sw, sb])
        in_specs.extend([
            pl.BlockSpec((tm, Ck), lambda i, j: (i, 0)),
            pl.BlockSpec((Ck, tn), lambda i, j: (0, j)),
            pl.BlockSpec((1, tn), lambda i, j: (0, j)),
        ])
    else:
        shortcut_mode = "none"

    grid = (Mp // tm, Np // tn)
    out = pl.pallas_call(
        functools.partial(_conv_matmul_kernel, relu=relu,
                          shortcut_mode=shortcut_mode),
        out_shape=jax.ShapeDtypeStruct((Mp, Np), jnp.bfloat16),
        grid_spec=pltpu.PrefetchScalarGridSpec(
            num_scalar_prefetch=0,
            grid=grid,
            in_specs=in_specs,
            out_specs=pl.BlockSpec((tm, tn), lambda i, j: (i, j)),
        ),
        compiler_params=pltpu.CompilerParams(
            dimension_semantics=("parallel", "parallel"),
            vmem_limit_bytes=32 * 1024 * 1024),
    )(*args)
    if (Mp, Np) != (M, n_out):
        out = out[:M, :n_out]
    return out


# ---------------------------------------------------------------------------
# Pallas kernel 2: fused "tail" — ResNet fc, EmbeddingBag-mean (as matmul) +
# text fc, LayerNorm(cnn), LayerNorm(text), concat-FC (split weight), ReLU.
# All operands are tiny; one un-gridded kernel, no 128-padding.
# ---------------------------------------------------------------------------
def _tail_kernel(feat_ref, cw_ref, cb_ref, sel_ref, emb_ref, tw_ref, tb_ref,
                 cg_ref, cbeta_ref, tg_ref, tbeta_ref, wt_ref, wc_ref, hb_ref,
                 o_ref):
    eps = 1e-5

    def layer_norm(x, g, b):
        m = jnp.mean(x, axis=-1, keepdims=True)
        v = jnp.mean((x - m) ** 2, axis=-1, keepdims=True)
        return (x - m) * lax.rsqrt(v + eps) * g + b

    # ResNet fc: pooled features -> 5 logits
    cnn_logits = (jnp.dot(feat_ref[...], cw_ref[...],
                          preferred_element_type=jnp.float32) + cb_ref[...])
    # EmbeddingBag mean (selection-matrix matmul) + text fc
    bag = jnp.dot(sel_ref[...], emb_ref[...],
                  preferred_element_type=jnp.float32)
    txt_logits = (jnp.dot(bag, tw_ref[...],
                          preferred_element_type=jnp.float32) + tb_ref[...])
    # LayerNorms + (eval-mode) dropout + cat + Linear(10,5) + ReLU
    cn = layer_norm(cnn_logits, cg_ref[...], cbeta_ref[...])
    tn = layer_norm(txt_logits, tg_ref[...], tbeta_ref[...])
    out = (jnp.dot(tn, wt_ref[...], preferred_element_type=jnp.float32)
           + jnp.dot(cn, wc_ref[...], preferred_element_type=jnp.float32)
           + hb_ref[...])
    o_ref[...] = jnp.maximum(out, 0.0)


def pallas_tail(params, feat, S, gathered):
    cp, tp, hp = params["cnn"], params["text"], params["head"]
    B = feat.shape[0]
    C = hp["fc_b"].shape[0]          # num_class
    w = hp["fc_w"]                    # (2C, C): rows [text half ; cnn half]
    args = (
        feat.astype(jnp.float32),
        cp["fc_w"].astype(jnp.float32),
        cp["fc_b"].reshape(1, C).astype(jnp.float32),
        S.astype(jnp.float32),
        gathered.astype(jnp.float32),
        tp["fc_w"].astype(jnp.float32),
        tp["fc_b"].reshape(1, C).astype(jnp.float32),
        hp["cnn_g"].reshape(1, C),
        hp["cnn_b"].reshape(1, C),
        hp["txt_g"].reshape(1, C),
        hp["txt_b"].reshape(1, C),
        w[:C, :], w[C:, :],
        hp["fc_b"].reshape(1, C),
    )
    return pl.pallas_call(
        _tail_kernel,
        out_shape=jax.ShapeDtypeStruct((B, C), jnp.float32),
    )(*args)


# ---------------------------------------------------------------------------
# Conv / pooling glue (im2col in bf16, window slicing). Compute runs in Pallas.
# ---------------------------------------------------------------------------
def conv2d(x, conv, stride, padding, relu, shortcut=None, shortcut_proj=None):
    """x: (B,H,W,Cin) bf16 NHWC. conv: prepared dict (BN folded, bf16, padded)."""
    B, H, W, C = x.shape
    kh, kw, cout = conv["kh"], conv["kw"], conv["cout"]
    if padding:
        x = jnp.pad(x, ((0, 0), (padding, padding), (padding, padding), (0, 0)))
    Hout = (H + 2 * padding - kh) // stride + 1
    Wout = (W + 2 * padding - kw) // stride + 1
    cols = []
    for i in range(kh):
        for j in range(kw):
            cols.append(x[:, i:i + stride * Hout:stride,
                          j:j + stride * Wout:stride, :])
    patches = jnp.concatenate(cols, axis=-1) if len(cols) > 1 else cols[0]
    a = patches.reshape(B * Hout * Wout, kh * kw * C)
    s2 = None
    if shortcut is not None:
        s2 = shortcut.reshape(B * Hout * Wout, cout)
    out = pallas_conv_matmul(a, conv["wm"], conv["b"], cout, relu=relu,
                             shortcut=s2, shortcut_proj=shortcut_proj)
    return out.reshape(B, Hout, Wout, cout)


def maxpool2d(x, k=3, stride=2, padding=1):
    B, H, W, C = x.shape
    xp = jnp.pad(x, ((0, 0), (padding, padding), (padding, padding), (0, 0)),
                 constant_values=-jnp.inf)
    Hout = (H + 2 * padding - k) // stride + 1
    Wout = (W + 2 * padding - k) // stride + 1
    out = None
    for i in range(k):
        for j in range(k):
            s = xp[:, i:i + stride * Hout:stride, j:j + stride * Wout:stride, :]
            out = s if out is None else jnp.maximum(out, s)
    return out


# ---------------------------------------------------------------------------
# Parameter initialization (deterministic, synthetic "pretrained" weights).
# BN is folded into conv weight/bias; weights are padded + bf16-cast once here.
# ---------------------------------------------------------------------------
def _init_conv_bn(key, kh, kw, cin, cout):
    kwgt, kg, kb, km, kv = jax.random.split(key, 5)
    w = jax.random.normal(kwgt, (kh, kw, cin, cout), jnp.float32) * 0.05
    gamma = jax.random.uniform(kg, (cout,), jnp.float32, 0.5, 1.5)
    beta = jax.random.normal(kb, (cout,), jnp.float32) * 0.1
    mean = jax.random.normal(km, (cout,), jnp.float32) * 0.1
    var = jax.random.uniform(kv, (cout,), jnp.float32, 0.5, 1.5)
    scale = gamma / jnp.sqrt(var + 1e-5)      # eval-mode BN fold
    shift = beta - mean * scale
    return w * scale, shift


def _prep_conv(key, kh, kw, cin, cout):
    """Fold BN, reshape to matmul form, pad (K to 16, N to 128), cast to bf16 — once."""
    w, bias = _init_conv_bn(key, kh, kw, cin, cout)
    K, N = kh * kw * cin, cout
    Kp, Np = _round_up(K, 16), _round_up(N, 128)
    wm = jnp.pad(w.reshape(K, N), ((0, Kp - K), (0, Np - N))).astype(jnp.bfloat16)
    b = jnp.pad(bias, (0, Np - N)).reshape(1, Np).astype(jnp.float32)
    return {"wm": wm, "b": b, "kh": kh, "kw": kw, "cout": cout}


def init_resnet18(key, num_classes=5):
    keys = iter(jax.random.split(key, 64))
    params = {"stem": _prep_conv(next(keys), 7, 7, 3, 64)}
    cfg = [(64, 64, 1), (64, 128, 2), (128, 256, 2), (256, 512, 2)]
    layers = []
    for cin, cout, stride in cfg:
        blocks = []
        for b in range(2):
            s = stride if b == 0 else 1
            bin_ = cin if b == 0 else cout
            blk = {
                "stride": s,
                "conv1": _prep_conv(next(keys), 3, 3, bin_, cout),
                "conv2": _prep_conv(next(keys), 3, 3, cout, cout),
            }
            if s != 1 or bin_ != cout:
                blk["down"] = _prep_conv(next(keys), 1, 1, bin_, cout)
            blocks.append(blk)
        layers.append(blocks)
    params["layers"] = layers
    params["fc_w"] = jax.random.normal(next(keys), (512, num_classes),
                                       jnp.float32) * 0.05
    params["fc_b"] = jnp.zeros((num_classes,), jnp.float32)
    return params


def init_text_model(key, vocab_size, embed_dim, num_class):
    k1, k2 = jax.random.split(key)
    return {
        "emb": jax.random.uniform(k1, (vocab_size, embed_dim), jnp.float32,
                                  -0.5, 0.5),
        "fc_w": jax.random.uniform(k2, (embed_dim, num_class), jnp.float32,
                                   -0.5, 0.5),
        "fc_b": jnp.zeros((num_class,), jnp.float32),
    }


def init_head(key, num_class):
    k1, k2 = jax.random.split(key)
    return {
        "txt_g": jnp.ones((num_class,), jnp.float32),
        "txt_b": jnp.zeros((num_class,), jnp.float32),
        "cnn_g": jnp.ones((num_class,), jnp.float32),
        "cnn_b": jnp.zeros((num_class,), jnp.float32),
        "fc_w": jax.random.normal(k1, (2 * num_class, num_class),
                                  jnp.float32) * 0.1,
        "fc_b": jax.random.normal(k2, (num_class,), jnp.float32) * 0.1,
    }


def init_model(key, vocab_size, text_embed_dim, num_class=5):
    k1, k2, k3 = jax.random.split(key, 3)
    return {
        "cnn": init_resnet18(k1, num_class),
        "text": init_text_model(k2, vocab_size, text_embed_dim, num_class),
        "head": init_head(k3, num_class),
    }


# ---------------------------------------------------------------------------
# Forward passes.
# ---------------------------------------------------------------------------
def resnet18_features(params, x_nchw):
    # Single cast to bf16 at the top; every layer consumes/produces bf16 activations.
    x = jnp.transpose(x_nchw, (0, 2, 3, 1)).astype(jnp.bfloat16)  # NCHW -> NHWC
    x = conv2d(x, params["stem"], stride=2, padding=3, relu=True)
    x = maxpool2d(x, 3, 2, 1)
    for blocks in params["layers"]:
        for blk in blocks:
            s = blk["stride"]
            out1 = conv2d(x, blk["conv1"], stride=s, padding=1, relu=True)
            if "down" in blk:
                # 1x1 stride-s downsample is fused into the conv2 kernel (extra matmul).
                B, H, W, C = x.shape
                sx = x[:, ::s, ::s, :].reshape(-1, C)
                x = conv2d(out1, blk["conv2"], stride=1, padding=1, relu=True,
                           shortcut_proj=(sx, blk["down"]["wm"], blk["down"]["b"]))
            else:
                # conv2 + BN + residual add + ReLU fused in one Pallas epilogue
                x = conv2d(out1, blk["conv2"], stride=1, padding=1, relu=True,
                           shortcut=x)
    return jnp.mean(x.astype(jnp.float32), axis=(1, 2))   # global average pool (B, 512)


def text_embedding_inputs(tp, ids, offsets):
    # nn.EmbeddingBag(mode='mean', padding_idx=0): per-bag mean over non-padding
    # tokens, expressed as a (nb, T) selection matrix; the matmul itself runs
    # inside the fused Pallas tail kernel.
    T = ids.shape[0]
    nb = offsets.shape[0]
    tok = jnp.arange(T)
    bag_id = jnp.sum(tok[None, :] >= offsets[:, None], axis=0) - 1     # (T,)
    valid = (ids != 0).astype(jnp.float32)                             # skip padding_idx
    sel = (bag_id[None, :] == jnp.arange(nb)[:, None]).astype(jnp.float32)
    sel = sel * valid[None, :]
    counts = jnp.maximum(jnp.sum(sel, axis=1, keepdims=True), 1.0)
    S = sel / counts                                                   # (nb, T)
    gathered = tp["emb"][ids]                                          # (T, D) gather (glue)
    return S, gathered


def custom_resnet_text_cat_forward(params, audio_arrays, ids, offsets):
    feat = resnet18_features(params["cnn"], audio_arrays)              # (B, 512)
    S, gathered = text_embedding_inputs(params["text"], ids, offsets)
    # ResNet fc + text fc + LayerNorms + cat + Linear(10,5) + ReLU: one kernel.
    return pallas_tail(params, feat, S, gathered)


# ---------------------------------------------------------------------------
if __name__ == "__main__":
    key = jax.random.PRNGKey(0)
    k_params, k_img, k_ids = jax.random.split(key, 3)

    VOCAB = 50
    TEXT_EMBED = 32
    NUM_CLASS = 5

    params = init_model(k_params, vocab_size=VOCAB, text_embed_dim=TEXT_EMBED,
                        num_class=NUM_CLASS)

    audio_arrays = jax.random.normal(k_img, (2, 3, 64, 64), jnp.float32)   # NCHW
    ids = jax.random.randint(k_ids, (12,), 0, VOCAB, dtype=jnp.int32)      # flat tokens
    offsets = jnp.array([0, 7], dtype=jnp.int32)                           # 2 bags

    out = custom_resnet_text_cat_forward(params, audio_arrays, ids, offsets)
    jax.block_until_ready(out)
    assert out.shape == (2, NUM_CLASS)
    print("KERNEL_OK")
</pallas_src>

<mosaic_0001>
module attributes {stable_mosaic.version = 11 : i64} {
  func.func @_conv_matmul_kernel(%arg0: i32, %arg1: i32, %arg2: memref<1024x160xbf16, #tpu.memory_space<vmem>>, %arg3: memref<160x128xbf16, #tpu.memory_space<vmem>>, %arg4: memref<1x128xf32, #tpu.memory_space<vmem>>, %arg5: memref<1024x128xbf16, #tpu.memory_space<vmem>>) attributes {dimension_semantics = [#tpu.dimension_semantics<parallel>, #tpu.dimension_semantics<parallel>], iteration_bounds = array<i64: 2, 1>, scalar_prefetch = 0 : i64, scratch_operands = 0 : i64, tpu.core_type = #tpu.core_type<tc>, window_params = [{transform_indices = @transform_0, window_bounds = array<i64: 1024, 160>}, {transform_indices = @transform_1, window_bounds = array<i64: 160, 128>}, {transform_indices = @transform_2, window_bounds = array<i64: 1, 128>}, {transform_indices = @transform_3, window_bounds = array<i64: 1024, 128>}]} {
    %c0 = arith.constant 0 : index
    %c0_0 = arith.constant 0 : index
    %0 = vector.load %arg2[%c0, %c0_0] : memref<1024x160xbf16, #tpu.memory_space<vmem>>, vector<1024x160xbf16>
    %c0_1 = arith.constant 0 : index
    %c0_2 = arith.constant 0 : index
    %1 = vector.load %arg3[%c0_1, %c0_2] : memref<160x128xbf16, #tpu.memory_space<vmem>>, vector<160x128xbf16>
    %cst = arith.constant dense<0.000000e+00> : vector<1024x128xf32>
    %2 = tpu.matmul %0, %1, %cst {dimension_numbers = #tpu.dot_dimension_numbers<[1], [0], [0], [1], [0, 0, 1, 1], [], []>} : vector<1024x160xbf16>, vector<160x128xbf16>, vector<1024x128xf32> -> vector<1024x128xf32>
    %c0_3 = arith.constant 0 : index
    %c0_4 = arith.constant 0 : index
    %3 = vector.load %arg4[%c0_3, %c0_4] : memref<1x128xf32, #tpu.memory_space<vmem>>, vector<1x128xf32>
    %4 = vector.broadcast %3 : vector<1x128xf32> to vector<1024x128xf32>
    %5 = arith.addf %2, %4 : vector<1024x128xf32>
    %cst_5 = arith.constant 0.000000e+00 : f32
    %6 = vector.broadcast %cst_5 : f32 to vector<1024x128xf32>
    %7 = arith.maximumf %5, %6 : vector<1024x128xf32>
    %8 = arith.truncf %7 : vector<1024x128xf32> to vector<1024x128xbf16>
    %c0_6 = arith.constant 0 : index
    %c0_7 = arith.constant 0 : index
    %9 = vector.load %arg5[%c0_6, %c0_7] : memref<1024x128xbf16, #tpu.memory_space<vmem>>, vector<1024x128xbf16>
    tpu.vector_store %arg5[%c0_6, %c0_7], %8 {strides = array<i32>} : memref<1024x128xbf16, #tpu.memory_space<vmem>>, vector<1024x128xbf16>,
    return
  }
  func.func @transform_0(%arg0: i32, %arg1: i32) -> (i32, i32) {
    %c0_i32 = arith.constant 0 : i32
    %c0_i32_0 = arith.constant 0 : i32
    return %arg0, %c0_i32 : i32, i32
  }
  func.func @transform_1(%arg0: i32, %arg1: i32) -> (i32, i32) {
    %c0_i32 = arith.constant 0 : i32
    %c0_i32_0 = arith.constant 0 : i32
    return %c0_i32, %arg1 : i32, i32
  }
  func.func @transform_2(%arg0: i32, %arg1: i32) -> (i32, i32) {
    %c0_i32 = arith.constant 0 : i32
    %c0_i32_0 = arith.constant 0 : i32
    return %c0_i32, %arg1 : i32, i32
  }
  func.func @transform_3(%arg0: i32, %arg1: i32) -> (i32, i32) {
    %c0_i32 = arith.constant 0 : i32
    return %arg0, %arg1 : i32, i32
  }
}

</mosaic_0001>

<llo_original>
// kernel: tpu_custom_call.1
$region0: #{tpu_custom_call.1}
  #allocation0 [shape = 'u32[]', space=smem, size = 0x4, offset = 0x4, fixed_abs, tag = 'smem constant byte address 0x4 - core index']
  #allocation1 [shape = 'u32[144,128]{1,0:T(1,128)}', space=vmem, size = 0x12000, scoped, tag = 'internal scratch']
  %s0 = inlined_call_operand.vmem [shape: bf16[2048,160], index: 0, kind: input, shape index: {}]
  %s1 = inlined_call_operand.vmem [shape: bf16[160,128], index: 1, kind: input, shape index: {}]
  %s2 = inlined_call_operand.vmem [shape: f32[1,128], index: 2, kind: input, shape index: {}]
  %s3 = inlined_call_operand.hbm [shape: bf16[2048,128], index: 3, kind: output, shape index: {}]
  %s4 = sld [smem:[#allocation0]]
  $region45: #{tpu_custom_call.1} parent=0
    _
  %s6 = ssub.s32 1, %s4
  %s7 = scalar_select 0, %s6, %s4
  $region1: #{tpu_custom_call.1} parent=0
    #allocation2 [shape = 'u8[524288]{0}', space=vmem, size = 0x80000, scoped, tag = 'output window, operand 0']
    #allocation3 [shape = 's32[2]{0}', space=sflag, size = 0x8, scoped, tag = 'scoped memory for tpu_custom_call.1']
    %8 = vsyncpa [#allocation3], 0
    %s9 = scalar_lea.sflag [#allocation3], 1
    %10 = vsyncpa %s9, 0
    loop: start=0, step=1, limit=4
    $region2: #{tpu_custom_call.1} parent=1 // loop_pre_header
      _
    $region3: #{tpu_custom_call.1} parent=1 // loop_header
      %s12 = sphi 0, %s16
      %p13 = scmp.ge.s32.totalorder %s12, 4
      %s19 = sphi 0, %s31
      %s20 = sphi 0, %s27
      %s21 = sphi 0, %s19
      %s22 = sphi 0, %s20
      %s23 = sphi 0, %s21
      %s24 = sphi 0, %s22
      %s34 = sphi 0, %s36
      %s37 = sphi 0, %s34
      %s38 = sphi 0, %s37
      %s54 = sphi 0, %s38
      %s60 = sphi 0, %s62
      %s63 = sphi 0, %s60
      %s64 = sphi 0, %s63
      %s80 = sphi 0, %s64
      %s86 = sphi 0, %s88
      %s89 = sphi 0, %s86
      %s90 = sphi 0, %s89
      %s106 = sphi 0, %s90
      %s114 = sphi 0, %s116
      %s117 = sphi 0, %s114
      %s118 = sphi 0, %s117
      %s134 = sphi 0, %s118
    $region4: #{tpu_custom_call.1} parent=1 // loop_header_branch
      %15 = sbr.rel (%p13) target = $region8
    $region5: #{tpu_custom_call.1} parent=1 // loop_body
      %s17 = ssub.s32 %s12, 1
      %s18 = ssub.s32 %s12, 2
      %s25 = sadd.s32 1, %s20
      %p26 = scmp.ge.s32.totalorder %s25, 1
      %s27 = scalar_select %p26, 0, %s25
      %s28 = sadd.s32 1, %s19
      %s29 = scalar_select %p26, %s28, %s19
      %p30 = scmp.ge.s32.totalorder %s29, 2
      %s31 = scalar_select %p30, 0, %s29
      %s32 = ssub.s32 %s19, %s31
      %p33 = scmp.eq.s32.totalorder %s32, 0
      %s35 = sadd.s32 %s34, 1
      %s36 = scalar_select %p33, %s34, %s35
      %p39 = pneg %p33
      %p40 = scmp.eq.s32.totalorder %s12, 1
      %p41 = por %p39, %p40
      %p42 = scmp.ne.s32.totalorder %s34, %s37
      %p43 = scmp.eq.s32.totalorder %s12, 0
      %p44 = por %p42, %p43
      %p45 = scmp.ne.s32.totalorder %s34, %s37
      %p46 = scmp.eq.s32.totalorder %s17, 1
      %p47 = por %p45, %p46
      %p48 = scmp.ne.s32.totalorder %s37, %s38
      %p49 = scmp.eq.s32.totalorder %s17, 0
      %p50 = por %p48, %p49
      %p51 = scmp.ne.s32.totalorder %s37, %s38
      %p52 = scmp.eq.s32.totalorder %s18, 1
      %p53 = por %p51, %p52
      %p55 = scmp.ne.s32.totalorder %s38, %s54
      %p56 = scmp.eq.s32.totalorder %s18, 0
      %p57 = por %p55, %p56
      %s58 = ssub.s32 %s20, %s27
      %p59 = scmp.eq.s32.totalorder %s58, 0
      %s61 = sadd.s32 %s60, 1
      %s62 = scalar_select %p59, %s60, %s61
      %p65 = pneg %p59
      %p66 = scmp.eq.s32.totalorder %s12, 1
      %p67 = por %p65, %p66
      %p68 = scmp.ne.s32.totalorder %s60, %s63
      %p69 = scmp.eq.s32.totalorder %s12, 0
      %p70 = por %p68, %p69
      %p71 = scmp.ne.s32.totalorder %s60, %s63
      %p72 = scmp.eq.s32.totalorder %s17, 1
      %p73 = por %p71, %p72
      %p74 = scmp.ne.s32.totalorder %s63, %s64
      %p75 = scmp.eq.s32.totalorder %s17, 0
      %p76 = por %p74, %p75
      %p77 = scmp.ne.s32.totalorder %s63, %s64
      %p78 = scmp.eq.s32.totalorder %s18, 1
      %p79 = por %p77, %p78
      %p81 = scmp.ne.s32.totalorder %s64, %s80
      %p82 = scmp.eq.s32.totalorder %s18, 0
      %p83 = por %p81, %p82
      %s84 = ssub.s32 %s20, %s27
      %p85 = scmp.eq.s32.totalorder %s84, 0
      %s87 = sadd.s32 %s86, 1
      %s88 = scalar_select %p85, %s86, %s87
      %p91 = pneg %p85
      %p92 = scmp.eq.s32.totalorder %s12, 1
      %p93 = por %p91, %p92
      %p94 = scmp.ne.s32.totalorder %s86, %s89
      %p95 = scmp.eq.s32.totalorder %s12, 0
      %p96 = por %p94, %p95
      %p97 = scmp.ne.s32.totalorder %s86, %s89
      %p98 = scmp.eq.s32.totalorder %s17, 1
      %p99 = por %p97, %p98
      %p100 = scmp.ne.s32.totalorder %s89, %s90
      %p101 = scmp.eq.s32.totalorder %s17, 0
      %p102 = por %p100, %p101
      %p103 = scmp.ne.s32.totalorder %s89, %s90
      %p104 = scmp.eq.s32.totalorder %s18, 1
      %p105 = por %p103, %p104
      %p107 = scmp.ne.s32.totalorder %s90, %s106
      %p108 = scmp.eq.s32.totalorder %s18, 0
      %p109 = por %p107, %p108
      %s110 = ssub.s32 %s19, %s31
      %s111 = ssub.s32 %s20, %s27
      %s112 = sor.u32 %s110, %s111
      %p113 = scmp.eq.s32.totalorder %s112, 0
      %s115 = sadd.s32 %s114, 1
      %s116 = scalar_select %p113, %s114, %s115
      %p119 = pneg %p113
      %p120 = scmp.eq.s32.totalorder %s12, 1
      %p121 = por %p119, %p120
      %p122 = scmp.ne.s32.totalorder %s114, %s117
      %p123 = scmp.eq.s32.totalorder %s12, 0
      %p124 = por %p122, %p123
      %p125 = scmp.ne.s32.totalorder %s114, %s117
      %p126 = scmp.eq.s32.totalorder %s17, 1
      %p127 = por %p125, %p126
      %p128 = scmp.ne.s32.totalorder %s117, %s118
      %p129 = scmp.eq.s32.totalorder %s17, 0
      %p130 = por %p128, %p129
      %p131 = scmp.ne.s32.totalorder %s117, %s118
      %p132 = scmp.eq.s32.totalorder %s18, 1
      %p133 = por %p131, %p132
      %p135 = scmp.ne.s32.totalorder %s118, %s134
      %p136 = scmp.eq.s32.totalorder %s18, 0
      %p137 = por %p135, %p136
      %p138 = scmp.le.s32.totalorder 1, %s12
      %p139 = scmp.lt.s32.totalorder %s12, 3
      %p140 = pnand %p138, %p139
      %p141 = pneg %p140
      // Predicated region
      $region9: #{tpu_custom_call.1} parent=5 // pred_check
        _
      $region10: #{tpu_custom_call.1} parent=5 // pred_check_branch
        %143 = sbr.rel (%p140) target = $region12
      $region11: #{tpu_custom_call.1} parent=5 // pred_region
        %s144 = ssub.s32 %s12, 1
        // Predicated region
        $region13: #{tpu_custom_call.1} parent=11 // pred_check
          %p145 = pneg %p76
        $region14: #{tpu_custom_call.1} parent=11 // pred_check_branch
          %147 = sbr.rel (%p145) target = $region16
        $region15: #{tpu_custom_call.1} parent=11 // pred_region
          %p148 = scmp.lt.s32.totalorder %s22, 0
          %s149 = scalar_select %p148, %s22, 0
          %s150 = smul.addr %s149, 4
          %s151 = scalar_lea.vmem %s1, %s150
        $region16: #{tpu_custom_call.1} parent=11 // pred_fallthru
          _
        // Predicated region
        $region17: #{tpu_custom_call.1} parent=11 // pred_check
          %p152 = pneg %p102
        $region18: #{tpu_custom_call.1} parent=11 // pred_check_branch
          %154 = sbr.rel (%p152) target = $region20
        $region19: #{tpu_custom_call.1} parent=11 // pred_region
          %p155 = scmp.lt.s32.totalorder %s22, 0
          %s156 = scalar_select %p155, %s22, 0
          %s157 = scalar_lea.vmem %s2, %s156
        $region20: #{tpu_custom_call.1} parent=11 // pred_fallthru
          _
      $region12: #{tpu_custom_call.1} parent=5 // pred_fallthru
        _
      %p158 = scmp.lt.s32.totalorder %s12, 2
      // Predicated region
      $region21: #{tpu_custom_call.1} parent=5 // pred_check
        %p159 = pneg %p158
      $region22: #{tpu_custom_call.1} parent=5 // pred_check_branch
        %161 = sbr.rel (%p159) target = $region24
      $region23: #{tpu_custom_call.1} parent=5 // pred_region
        // Predicated region
        $region25: #{tpu_custom_call.1} parent=23 // pred_check
          %p162 = pneg %p44
        $region26: #{tpu_custom_call.1} parent=23 // pred_check_branch
          %164 = sbr.rel (%p162) target = $region28
        $region27: #{tpu_custom_call.1} parent=23 // pred_region
          %s165 = smul.u32 128, %s19
          %p166 = scmp.lt.s32.totalorder %s165, 255
          %s167 = scalar_select %p166, %s165, 255
          %s168 = smul.addr %s167, 2
          %s169 = smul.addr %s168, 4
          %s170 = scalar_lea.vmem %s0, %s169
          %s171 = smul.u32 128, %s19
        $region28: #{tpu_custom_call.1} parent=23 // pred_fallthru
          _
      $region24: #{tpu_custom_call.1} parent=5 // pred_fallthru
        _
      %p172 = scmp.le.s32.totalorder 1, %s12
      %p173 = scmp.lt.s32.totalorder %s12, 3
      %p174 = pnand %p172, %p173
      %p175 = pneg %p174
      // Predicated region
      $region29: #{tpu_custom_call.1} parent=5 // pred_check
        _
      $region30: #{tpu_custom_call.1} parent=5 // pred_check_branch
        %177 = sbr.rel (%p174) target = $region32
      $region31: #{tpu_custom_call.1} parent=5 // pred_region
        %s178 = ssub.s32 %s12, 1
        %s179 = smul.u32 128, %s21
        %p180 = scmp.lt.s32.totalorder %s179, 255
        %s181 = scalar_select %p180, %s179, 255
        %s182 = smul.addr %s181, 2
        %s183 = smul.addr %s182, 4
        %s184 = scalar_lea.vmem %s0, %s183
        %p185 = pneg %p50
        %p186 = pneg %p47
        %p187 = scmp.lt.s32.totalorder %s22, 0
        %s188 = scalar_select %p187, %s22, 0
        %s189 = smul.addr %s188, 4
        %s190 = scalar_lea.vmem %s1, %s189
        %p191 = pneg %p76
        %p192 = pneg %p73
        %p193 = scmp.lt.s32.totalorder %s22, 0
        %s194 = scalar_select %p193, %s22, 0
        %s195 = scalar_lea.vmem %s2, %s194
        %p196 = pneg %p102
        %p197 = pneg %p99
        %p198 = pneg %p130
        %p199 = pneg %p127
        %s200 = sand.u32 %s117, 1
        %s201 = scalar_lea.sflag [#allocation3], %s200
        %s202 = sand.u32 %s117, 1
        %s203 = smul.addr %s202, 512
        %s204 = scalar_lea.vmem [#allocation2], %s203
        %s205 = smul.u32 128, %s21
        %p206 = scmp.lt.s32.totalorder %s205, 255
        %s207 = scalar_select %p206, %s205, 255
        %s208 = smul.addr %s207, 2
        %s209 = smul.addr %s208, 4
        %s210 = scalar_lea.vmem %s0, %s209
        %s211 = smul.u32 128, %s21
        %p212 = scmp.lt.s32.totalorder %s22, 0
        %s213 = scalar_select %p212, %s22, 0
        %s214 = smul.addr %s213, 4
        %s215 = scalar_lea.vmem %s1, %s214
        %p216 = scmp.lt.s32.totalorder %s22, 0
        %s217 = scalar_select %p216, %s22, 0
        %s218 = scalar_lea.vmem %s2, %s217
        %s219 = smul.u32 128, %s21
        %v221 = vld [vmem:[%s210] sm:$0xff]
        %v222 = vld [vmem:[%s210 + $0x8] sm:$0xff]
        %v223 = vld [vmem:[%s210 + $0x10] sm:$0xff]
        %v224 = vld [vmem:[%s210 + $0x18] sm:$0xff]
        %v225 = vld [vmem:[%s210 + $0x20] sm:$0xff]
        %v226 = vld [vmem:[%s210 + $0x28] sm:$0xff]
        %v227 = vld [vmem:[%s210 + $0x30] sm:$0xff]
        %v228 = vld [vmem:[%s210 + $0x38] sm:$0xff]
        %v229 = vld [vmem:[%s210 + $0x40] sm:$0xff]
        %v230 = vld [vmem:[%s210 + $0x48] sm:$0xff]
        %v231 = vld [vmem:[%s210 + $0x50] sm:$0xff]
        %v232 = vld [vmem:[%s210 + $0x58] sm:$0xff]
        %v233 = vld [vmem:[%s210 + $0x60] sm:$0xff]
        %v234 = vld [vmem:[%s210 + $0x68] sm:$0xff]
        %v235 = vld [vmem:[%s210 + $0x70] sm:$0xff]
        %v236 = vld [vmem:[%s210 + $0x78] sm:$0xff]
        %v237 = vld [vmem:[%s210 + $0x80] sm:$0xff]
        %v238 = vld [vmem:[%s210 + $0x88] sm:$0xff]
        %v239 = vld [vmem:[%s210 + $0x90] sm:$0xff]
        %v240 = vld [vmem:[%s210 + $0x98] sm:$0xff]
        %v241 = vld [vmem:[%s210 + $0xa0] sm:$0xff]
        %v242 = vld [vmem:[%s210 + $0xa8] sm:$0xff]
        %v243 = vld [vmem:[%s210 + $0xb0] sm:$0xff]
        %v244 = vld [vmem:[%s210 + $0xb8] sm:$0xff]
        %v245 = vld [vmem:[%s210 + $0xc0] sm:$0xff]
        %v246 = vld [vmem:[%s210 + $0xc8] sm:$0xff]
        %v247 = vld [vmem:[%s210 + $0xd0] sm:$0xff]
        %v248 = vld [vmem:[%s210 + $0xd8] sm:$0xff]
        %v249 = vld [vmem:[%s210 + $0xe0] sm:$0xff]
        %v250 = vld [vmem:[%s210 + $0xe8] sm:$0xff]
        %v251 = vld [vmem:[%s210 + $0xf0] sm:$0xff]
        %v252 = vld [vmem:[%s210 + $0xf8] sm:$0xff]
        %v253 = vld [vmem:[%s210 + $0x100] sm:$0xff]
        %v254 = vld [vmem:[%s210 + $0x108] sm:$0xff]
        %v255 = vld [vmem:[%s210 + $0x110] sm:$0xff]
        %v256 = vld [vmem:[%s210 + $0x118] sm:$0xff]
        %v257 = vld [vmem:[%s210 + $0x120] sm:$0xff]
        %v258 = vld [vmem:[%s210 + $0x128] sm:$0xff]
        %v259 = vld [vmem:[%s210 + $0x130] sm:$0xff]
        %v260 = vld [vmem:[%s210 + $0x138] sm:$0xff]
        %v261 = vld [vmem:[%s210 + $0x140] sm:$0xff]
        %v262 = vld [vmem:[%s210 + $0x148] sm:$0xff]
        %v263 = vld [vmem:[%s210 + $0x150] sm:$0xff]
        %v264 = vld [vmem:[%s210 + $0x158] sm:$0xff]
        %v265 = vld [vmem:[%s210 + $0x160] sm:$0xff]
        %v266 = vld [vmem:[%s210 + $0x168] sm:$0xff]
        %v267 = vld [vmem:[%s210 + $0x170] sm:$0xff]
        %v268 = vld [vmem:[%s210 + $0x178] sm:$0xff]
        %v269 = vld [vmem:[%s210 + $0x180] sm:$0xff]
        %v270 = vld [vmem:[%s210 + $0x188] sm:$0xff]
        %v271 = vld [vmem:[%s210 + $0x190] sm:$0xff]
        %v272 = vld [vmem:[%s210 + $0x198] sm:$0xff]
        %v273 = vld [vmem:[%s210 + $0x1a0] sm:$0xff]
        %v274 = vld [vmem:[%s210 + $0x1a8] sm:$0xff]
        %v275 = vld [vmem:[%s210 + $0x1b0] sm:$0xff]
        %v276 = vld [vmem:[%s210 + $0x1b8] sm:$0xff]
        %v277 = vld [vmem:[%s210 + $0x1c0] sm:$0xff]
        %v278 = vld [vmem:[%s210 + $0x1c8] sm:$0xff]
        %v279 = vld [vmem:[%s210 + $0x1d0] sm:$0xff]
        %v280 = vld [vmem:[%s210 + $0x1d8] sm:$0xff]
        %v281 = vld [vmem:[%s210 + $0x1e0] sm:$0xff]
        %v282 = vld [vmem:[%s210 + $0x1e8] sm:$0xff]
        %v283 = vld [vmem:[%s210 + $0x1f0] sm:$0xff]
        %v284 = vld [vmem:[%s210 + $0x1f8] sm:$0xff]
        %v285 = vld [vmem:[%s210 + $0x200] sm:$0xff]
        %v286 = vld [vmem:[%s210 + $0x208] sm:$0xff]
        %v287 = vld [vmem:[%s210 + $0x210] sm:$0xff]
        %v288 = vld [vmem:[%s210 + $0x218] sm:$0xff]
        %v289 = vld [vmem:[%s210 + $0x220] sm:$0xff]
        %v290 = vld [vmem:[%s210 + $0x228] sm:$0xff]
        %v291 = vld [vmem:[%s210 + $0x230] sm:$0xff]
        %v292 = vld [vmem:[%s210 + $0x238] sm:$0xff]
        %v293 = vld [vmem:[%s210 + $0x240] sm:$0xff]
        %v294 = vld [vmem:[%s210 + $0x248] sm:$0xff]
        %v295 = vld [vmem:[%s210 + $0x250] sm:$0xff]
        %v296 = vld [vmem:[%s210 + $0x258] sm:$0xff]
        %v297 = vld [vmem:[%s210 + $0x260] sm:$0xff]
        %v298 = vld [vmem:[%s210 + $0x268] sm:$0xff]
        %v299 = vld [vmem:[%s210 + $0x270] sm:$0xff]
        %v300 = vld [vmem:[%s210 + $0x278] sm:$0xff]
        %v301 = vld [vmem:[%s210 + $0x280] sm:$0xff]
        %v302 = vld [vmem:[%s210 + $0x288] sm:$0xff]
        %v303 = vld [vmem:[%s210 + $0x290] sm:$0xff]
        %v304 = vld [vmem:[%s210 + $0x298] sm:$0xff]
        %v305 = vld [vmem:[%s210 + $0x2a0] sm:$0xff]
        %v306 = vld [vmem:[%s210 + $0x2a8] sm:$0xff]
        %v307 = vld [vmem:[%s210 + $0x2b0] sm:$0xff]
        %v308 = vld [vmem:[%s210 + $0x2b8] sm:$0xff]
        %v309 = vld [vmem:[%s210 + $0x2c0] sm:$0xff]
        %v310 = vld [vmem:[%s210 + $0x2c8] sm:$0xff]
        %v311 = vld [vmem:[%s210 + $0x2d0] sm:$0xff]
        %v312 = vld [vmem:[%s210 + $0x2d8] sm:$0xff]
        %v313 = vld [vmem:[%s210 + $0x2e0] sm:$0xff]
        %v314 = vld [vmem:[%s210 + $0x2e8] sm:$0xff]
        %v315 = vld [vmem:[%s210 + $0x2f0] sm:$0xff]
        %v316 = vld [vmem:[%s210 + $0x2f8] sm:$0xff]
        %v317 = vld [vmem:[%s210 + $0x300] sm:$0xff]
        %v318 = vld [vmem:[%s210 + $0x308] sm:$0xff]
        %v319 = vld [vmem:[%s210 + $0x310] sm:$0xff]
        %v320 = vld [vmem:[%s210 + $0x318] sm:$0xff]
        %v321 = vld [vmem:[%s210 + $0x320] sm:$0xff]
        %v322 = vld [vmem:[%s210 + $0x328] sm:$0xff]
        %v323 = vld [vmem:[%s210 + $0x330] sm:$0xff]
        %v324 = vld [vmem:[%s210 + $0x338] sm:$0xff]
        %v325 = vld [vmem:[%s210 + $0x340] sm:$0xff]
        %v326 = vld [vmem:[%s210 + $0x348] sm:$0xff]
        %v327 = vld [vmem:[%s210 + $0x350] sm:$0xff]
        %v328 = vld [vmem:[%s210 + $0x358] sm:$0xff]
        %v329 = vld [vmem:[%s210 + $0x360] sm:$0xff]
        %v330 = vld [vmem:[%s210 + $0x368] sm:$0xff]
        %v331 = vld [vmem:[%s210 + $0x370] sm:$0xff]
        %v332 = vld [vmem:[%s210 + $0x378] sm:$0xff]
        %v333 = vld [vmem:[%s210 + $0x380] sm:$0xff]
        %v334 = vld [vmem:[%s210 + $0x388] sm:$0xff]
        %v335 = vld [vmem:[%s210 + $0x390] sm:$0xff]
        %v336 = vld [vmem:[%s210 + $0x398] sm:$0xff]
        %v337 = vld [vmem:[%s210 + $0x3a0] sm:$0xff]
        %v338 = vld [vmem:[%s210 + $0x3a8] sm:$0xff]
        %v339 = vld [vmem:[%s210 + $0x3b0] sm:$0xff]
        %v340 = vld [vmem:[%s210 + $0x3b8] sm:$0xff]
        %v341 = vld [vmem:[%s210 + $0x3c0] sm:$0xff]
        %v342 = vld [vmem:[%s210 + $0x3c8] sm:$0xff]
        %v343 = vld [vmem:[%s210 + $0x3d0] sm:$0xff]
        %v344 = vld [vmem:[%s210 + $0x3d8] sm:$0xff]
        %v345 = vld [vmem:[%s210 + $0x3e0] sm:$0xff]
        %v346 = vld [vmem:[%s210 + $0x3e8] sm:$0xff]
        %v347 = vld [vmem:[%s210 + $0x3f0] sm:$0xff]
        %v348 = vld [vmem:[%s210 + $0x3f8] sm:$0xff]
        %v349 = vld [vmem:[%s215] sm:$0xf]
        %v350 = vld [vmem:[%s215 + $0x4] sm:$0xf]
        %v351 = vld [vmem:[%s215 + $0x8] sm:$0xf]
        %v352 = vld [vmem:[%s215 + $0xc] sm:$0xf]
        %v353 = vld [vmem:[%s215 + $0x10] sm:$0xf]
        %v354 = vld [vmem:[%s215 + $0x14] sm:$0xf]
        %v355 = vld [vmem:[%s215 + $0x18] sm:$0xf]
        %v356 = vld [vmem:[%s215 + $0x1c] sm:$0xf]
        %v357 = vld [vmem:[%s215 + $0x20] sm:$0xf]
        %v358 = vld [vmem:[%s215 + $0x24] sm:$0xf]
        %v359 = vld [vmem:[%s215 + $0x28] sm:$0xf]
        %v360 = vld [vmem:[%s215 + $0x2c] sm:$0xf]
        %v361 = vld [vmem:[%s215 + $0x30] sm:$0xf]
        %v362 = vld [vmem:[%s215 + $0x34] sm:$0xf]
        %v363 = vld [vmem:[%s215 + $0x38] sm:$0xf]
        %v364 = vld [vmem:[%s215 + $0x3c] sm:$0xf]
        %v365 = vld [vmem:[%s215 + $0x40] sm:$0xf]
        %v366 = vld [vmem:[%s215 + $0x44] sm:$0xf]
        %v367 = vld [vmem:[%s215 + $0x48] sm:$0xf]
        %v368 = vld [vmem:[%s215 + $0x4c] sm:$0xf]
        %v369 = vld [vmem:[%s218] sm:$0x1]
        %v371 = vlaneseq
        %v372 = vshrl.u32 %v371, 7
        %v373 = vsub.s32 0, %v372
        %v374 = vrot.slane %v369, %v373
        %v504 = vunpack.c.l.b16 %v221
        %v505 = vunpack.c.h.b16 %v221
        %v506 = vunpack.c.l.b16 %v222
        %v507 = vunpack.c.h.b16 %v222
        %v508 = vunpack.c.l.b16 %v223
        %v509 = vunpack.c.h.b16 %v223
        %v510 = vunpack.c.l.b16 %v224
        %v511 = vunpack.c.h.b16 %v224
        %v512 = vunpack.c.l.b16 %v225
        %v513 = vunpack.c.h.b16 %v225
        %v514 = vunpack.c.l.b16 %v226
        %v515 = vunpack.c.h.b16 %v226
        %v516 = vunpack.c.l.b16 %v227
        %v517 = vunpack.c.h.b16 %v227
        %v518 = vunpack.c.l.b16 %v228
        %v519 = vunpack.c.h.b16 %v228
        %v520 = vunpack.c.l.b16 %v229
        %v521 = vunpack.c.h.b16 %v229
        %v522 = vunpack.c.l.b16 %v230
        %v523 = vunpack.c.h.b16 %v230
        %v524 = vunpack.c.l.b16 %v231
        %v525 = vunpack.c.h.b16 %v231
        %v526 = vunpack.c.l.b16 %v232
        %v527 = vunpack.c.h.b16 %v232
        %v528 = vunpack.c.l.b16 %v233
        %v529 = vunpack.c.h.b16 %v233
        %v530 = vunpack.c.l.b16 %v234
        %v531 = vunpack.c.h.b16 %v234
        %v532 = vunpack.c.l.b16 %v235
        %v533 = vunpack.c.h.b16 %v235
        %v534 = vunpack.c.l.b16 %v236
        %v535 = vunpack.c.h.b16 %v236
        %v536 = vunpack.c.l.b16 %v237
        %v537 = vunpack.c.h.b16 %v237
        %v538 = vunpack.c.l.b16 %v238
        %v539 = vunpack.c.h.b16 %v238
        %v540 = vunpack.c.l.b16 %v239
        %v541 = vunpack.c.h.b16 %v239
        %v542 = vunpack.c.l.b16 %v240
        %v543 = vunpack.c.h.b16 %v240
        %v544 = vunpack.c.l.b16 %v241
        %v545 = vunpack.c.h.b16 %v241
        %v546 = vunpack.c.l.b16 %v242
        %v547 = vunpack.c.h.b16 %v242
        %v548 = vunpack.c.l.b16 %v243
        %v549 = vunpack.c.h.b16 %v243
        %v550 = vunpack.c.l.b16 %v244
        %v551 = vunpack.c.h.b16 %v244
        %v552 = vunpack.c.l.b16 %v245
        %v553 = vunpack.c.h.b16 %v245
        %v554 = vunpack.c.l.b16 %v246
        %v555 = vunpack.c.h.b16 %v246
        %v556 = vunpack.c.l.b16 %v247
        %v557 = vunpack.c.h.b16 %v247
        %v558 = vunpack.c.l.b16 %v248
        %v559 = vunpack.c.h.b16 %v248
        %v560 = vunpack.c.l.b16 %v249
        %v561 = vunpack.c.h.b16 %v249
        %v562 = vunpack.c.l.b16 %v250
        %v563 = vunpack.c.h.b16 %v250
        %v564 = vunpack.c.l.b16 %v251
        %v565 = vunpack.c.h.b16 %v251
        %v566 = vunpack.c.l.b16 %v252
        %v567 = vunpack.c.h.b16 %v252
        %v568 = vunpack.c.l.b16 %v253
        %v569 = vunpack.c.h.b16 %v253
        %v570 = vunpack.c.l.b16 %v254
        %v571 = vunpack.c.h.b16 %v254
        %v572 = vunpack.c.l.b16 %v255
        %v573 = vunpack.c.h.b16 %v255
        %v574 = vunpack.c.l.b16 %v256
        %v575 = vunpack.c.h.b16 %v256
        %v576 = vunpack.c.l.b16 %v257
        %v577 = vunpack.c.h.b16 %v257
        %v578 = vunpack.c.l.b16 %v258
        %v579 = vunpack.c.h.b16 %v258
        %v580 = vunpack.c.l.b16 %v259
        %v581 = vunpack.c.h.b16 %v259
        %v582 = vunpack.c.l.b16 %v260
        %v583 = vunpack.c.h.b16 %v260
        %v584 = vunpack.c.l.b16 %v261
        %v585 = vunpack.c.h.b16 %v261
        %v586 = vunpack.c.l.b16 %v262
        %v587 = vunpack.c.h.b16 %v262
        %v588 = vunpack.c.l.b16 %v263
        %v589 = vunpack.c.h.b16 %v263
        %v590 = vunpack.c.l.b16 %v264
        %v591 = vunpack.c.h.b16 %v264
        %v592 = vunpack.c.l.b16 %v265
        %v593 = vunpack.c.h.b16 %v265
        %v594 = vunpack.c.l.b16 %v266
        %v595 = vunpack.c.h.b16 %v266
        %v596 = vunpack.c.l.b16 %v267
        %v597 = vunpack.c.h.b16 %v267
        %v598 = vunpack.c.l.b16 %v268
        %v599 = vunpack.c.h.b16 %v268
        %v600 = vunpack.c.l.b16 %v269
        %v601 = vunpack.c.h.b16 %v269
        %v602 = vunpack.c.l.b16 %v270
        %v603 = vunpack.c.h.b16 %v270
        %v604 = vunpack.c.l.b16 %v271
        %v605 = vunpack.c.h.b16 %v271
        %v606 = vunpack.c.l.b16 %v272
        %v607 = vunpack.c.h.b16 %v272
        %v608 = vunpack.c.l.b16 %v273
        %v609 = vunpack.c.h.b16 %v273
        %v610 = vunpack.c.l.b16 %v274
        %v611 = vunpack.c.h.b16 %v274
        %v612 = vunpack.c.l.b16 %v275
        %v613 = vunpack.c.h.b16 %v275
        %v614 = vunpack.c.l.b16 %v276
        %v615 = vunpack.c.h.b16 %v276
        %v616 = vunpack.c.l.b16 %v277
        %v617 = vunpack.c.h.b16 %v277
        %v618 = vunpack.c.l.b16 %v278
        %v619 = vunpack.c.h.b16 %v278
        %v620 = vunpack.c.l.b16 %v279
        %v621 = vunpack.c.h.b16 %v279
        %v622 = vunpack.c.l.b16 %v280
        %v623 = vunpack.c.h.b16 %v280
        %v624 = vunpack.c.l.b16 %v281
        %v625 = vunpack.c.h.b16 %v281
        %v626 = vunpack.c.l.b16 %v282
        %v627 = vunpack.c.h.b16 %v282
        %v628 = vunpack.c.l.b16 %v283
        %v629 = vunpack.c.h.b16 %v283
        %v630 = vunpack.c.l.b16 %v284
        %v631 = vunpack.c.h.b16 %v284
        %v632 = vunpack.c.l.b16 %v285
        %v633 = vunpack.c.h.b16 %v285
        %v634 = vunpack.c.l.b16 %v286
        %v635 = vunpack.c.h.b16 %v286
        %v636 = vunpack.c.l.b16 %v287
        %v637 = vunpack.c.h.b16 %v287
        %v638 = vunpack.c.l.b16 %v288
        %v639 = vunpack.c.h.b16 %v288
        %v640 = vunpack.c.l.b16 %v289
        %v641 = vunpack.c.h.b16 %v289
        %v642 = vunpack.c.l.b16 %v290
        %v643 = vunpack.c.h.b16 %v290
        %v644 = vunpack.c.l.b16 %v291
        %v645 = vunpack.c.h.b16 %v291
        %v646 = vunpack.c.l.b16 %v292
        %v647 = vunpack.c.h.b16 %v292
        %v648 = vunpack.c.l.b16 %v293
        %v649 = vunpack.c.h.b16 %v293
        %v650 = vunpack.c.l.b16 %v294
        %v651 = vunpack.c.h.b16 %v294
        %v652 = vunpack.c.l.b16 %v295
        %v653 = vunpack.c.h.b16 %v295
        %v654 = vunpack.c.l.b16 %v296
        %v655 = vunpack.c.h.b16 %v296
        %v656 = vunpack.c.l.b16 %v297
        %v657 = vunpack.c.h.b16 %v297
        %v658 = vunpack.c.l.b16 %v298
        %v659 = vunpack.c.h.b16 %v298
        %v660 = vunpack.c.l.b16 %v299
        %v661 = vunpack.c.h.b16 %v299
        %v662 = vunpack.c.l.b16 %v300
        %v663 = vunpack.c.h.b16 %v300
        %v664 = vunpack.c.l.b16 %v301
        %v665 = vunpack.c.h.b16 %v301
        %v666 = vunpack.c.l.b16 %v302
        %v667 = vunpack.c.h.b16 %v302
        %v668 = vunpack.c.l.b16 %v303
        %v669 = vunpack.c.h.b16 %v303
        %v670 = vunpack.c.l.b16 %v304
        %v671 = vunpack.c.h.b16 %v304
        %v672 = vunpack.c.l.b16 %v305
        %v673 = vunpack.c.h.b16 %v305
        %v674 = vunpack.c.l.b16 %v306
        %v675 = vunpack.c.h.b16 %v306
        %v676 = vunpack.c.l.b16 %v307
        %v677 = vunpack.c.h.b16 %v307
        %v678 = vunpack.c.l.b16 %v308
        %v679 = vunpack.c.h.b16 %v308
        %v680 = vunpack.c.l.b16 %v309
        %v681 = vunpack.c.h.b16 %v309
        %v682 = vunpack.c.l.b16 %v310
        %v683 = vunpack.c.h.b16 %v310
        %v684 = vunpack.c.l.b16 %v311
        %v685 = vunpack.c.h.b16 %v311
        %v686 = vunpack.c.l.b16 %v312
        %v687 = vunpack.c.h.b16 %v312
        %v688 = vunpack.c.l.b16 %v313
        %v689 = vunpack.c.h.b16 %v313
        %v690 = vunpack.c.l.b16 %v314
        %v691 = vunpack.c.h.b16 %v314
        %v692 = vunpack.c.l.b16 %v315
        %v693 = vunpack.c.h.b16 %v315
        %v694 = vunpack.c.l.b16 %v316
        %v695 = vunpack.c.h.b16 %v316
        %v696 = vunpack.c.l.b16 %v317
        %v697 = vunpack.c.h.b16 %v317
        %v698 = vunpack.c.l.b16 %v318
        %v699 = vunpack.c.h.b16 %v318
        %v700 = vunpack.c.l.b16 %v319
        %v701 = vunpack.c.h.b16 %v319
        %v702 = vunpack.c.l.b16 %v320
        %v703 = vunpack.c.h.b16 %v320
        %v704 = vunpack.c.l.b16 %v321
        %v705 = vunpack.c.h.b16 %v321
        %v706 = vunpack.c.l.b16 %v322
        %v707 = vunpack.c.h.b16 %v322
        %v708 = vunpack.c.l.b16 %v323
        %v709 = vunpack.c.h.b16 %v323
        %v710 = vunpack.c.l.b16 %v324
        %v711 = vunpack.c.h.b16 %v324
        %v712 = vunpack.c.l.b16 %v325
        %v713 = vunpack.c.h.b16 %v325
        %v714 = vunpack.c.l.b16 %v326
        %v715 = vunpack.c.h.b16 %v326
        %v716 = vunpack.c.l.b16 %v327
        %v717 = vunpack.c.h.b16 %v327
        %v718 = vunpack.c.l.b16 %v328
        %v719 = vunpack.c.h.b16 %v328
        %v720 = vunpack.c.l.b16 %v329
        %v721 = vunpack.c.h.b16 %v329
        %v722 = vunpack.c.l.b16 %v330
        %v723 = vunpack.c.h.b16 %v330
        %v724 = vunpack.c.l.b16 %v331
        %v725 = vunpack.c.h.b16 %v331
        %v726 = vunpack.c.l.b16 %v332
        %v727 = vunpack.c.h.b16 %v332
        %v728 = vunpack.c.l.b16 %v333
        %v729 = vunpack.c.h.b16 %v333
        %v730 = vunpack.c.l.b16 %v334
        %v731 = vunpack.c.h.b16 %v334
        %v732 = vunpack.c.l.b16 %v335
        %v733 = vunpack.c.h.b16 %v335
        %v734 = vunpack.c.l.b16 %v336
        %v735 = vunpack.c.h.b16 %v336
        %v736 = vunpack.c.l.b16 %v337
        %v737 = vunpack.c.h.b16 %v337
        %v738 = vunpack.c.l.b16 %v338
        %v739 = vunpack.c.h.b16 %v338
        %v740 = vunpack.c.l.b16 %v339
        %v741 = vunpack.c.h.b16 %v339
        %v742 = vunpack.c.l.b16 %v340
        %v743 = vunpack.c.h.b16 %v340
        %v744 = vunpack.c.l.b16 %v341
        %v745 = vunpack.c.h.b16 %v341
        %v746 = vunpack.c.l.b16 %v342
        %v747 = vunpack.c.h.b16 %v342
        %v748 = vunpack.c.l.b16 %v343
        %v749 = vunpack.c.h.b16 %v343
        %v750 = vunpack.c.l.b16 %v344
        %v751 = vunpack.c.h.b16 %v344
        %v752 = vunpack.c.l.b16 %v345
        %v753 = vunpack.c.h.b16 %v345
        %v754 = vunpack.c.l.b16 %v346
        %v755 = vunpack.c.h.b16 %v346
        %v756 = vunpack.c.l.b16 %v347
        %v757 = vunpack.c.h.b16 %v347
        %v758 = vunpack.c.l.b16 %v348
        %v759 = vunpack.c.h.b16 %v348
        %v760 = vpack.c.b16 %v506, %v504
        %v761 = vpack.c.b16 %v507, %v505
        %v762 = vpack.c.b16 %v510, %v508
        %v763 = vpack.c.b16 %v511, %v509
        %v764 = vpack.c.b16 %v514, %v512
        %v765 = vpack.c.b16 %v515, %v513
        %v766 = vpack.c.b16 %v518, %v516
        %v767 = vpack.c.b16 %v519, %v517
        %v768 = vpack.c.b16 %v522, %v520
        %v769 = vpack.c.b16 %v523, %v521
        %v770 = vpack.c.b16 %v526, %v524
        %v771 = vpack.c.b16 %v527, %v525
        %v772 = vpack.c.b16 %v530, %v528
        %v773 = vpack.c.b16 %v531, %v529
        %v774 = vpack.c.b16 %v534, %v532
        %v775 = vpack.c.b16 %v535, %v533
        %v776 = vpack.c.b16 %v538, %v536
        %v777 = vpack.c.b16 %v539, %v537
        %v778 = vpack.c.b16 %v542, %v540
        %v779 = vpack.c.b16 %v543, %v541
        %v780 = vpack.c.b16 %v546, %v544
        %v781 = vpack.c.b16 %v547, %v545
        %v782 = vpack.c.b16 %v550, %v548
        %v783 = vpack.c.b16 %v551, %v549
        %v784 = vpack.c.b16 %v554, %v552
        %v785 = vpack.c.b16 %v555, %v553
        %v786 = vpack.c.b16 %v558, %v556
        %v787 = vpack.c.b16 %v559, %v557
        %v788 = vpack.c.b16 %v562, %v560
        %v789 = vpack.c.b16 %v563, %v561
        %v790 = vpack.c.b16 %v566, %v564
        %v791 = vpack.c.b16 %v567, %v565
        %v792 = vpack.c.b16 %v570, %v568
        %v793 = vpack.c.b16 %v571, %v569
        %v794 = vpack.c.b16 %v574, %v572
        %v795 = vpack.c.b16 %v575, %v573
        %v796 = vpack.c.b16 %v578, %v576
        %v797 = vpack.c.b16 %v579, %v577
        %v798 = vpack.c.b16 %v582, %v580
        %v799 = vpack.c.b16 %v583, %v581
        %v800 = vpack.c.b16 %v586, %v584
        %v801 = vpack.c.b16 %v587, %v585
        %v802 = vpack.c.b16 %v590, %v588
        %v803 = vpack.c.b16 %v591, %v589
        %v804 = vpack.c.b16 %v594, %v592
        %v805 = vpack.c.b16 %v595, %v593
        %v806 = vpack.c.b16 %v598, %v596
        %v807 = vpack.c.b16 %v599, %v597
        %v808 = vpack.c.b16 %v602, %v600
        %v809 = vpack.c.b16 %v603, %v601
        %v810 = vpack.c.b16 %v606, %v604
        %v811 = vpack.c.b16 %v607, %v605
        %v812 = vpack.c.b16 %v610, %v608
        %v813 = vpack.c.b16 %v611, %v609
        %v814 = vpack.c.b16 %v614, %v612
        %v815 = vpack.c.b16 %v615, %v613
        %v816 = vpack.c.b16 %v618, %v616
        %v817 = vpack.c.b16 %v619, %v617
        %v818 = vpack.c.b16 %v622, %v620
        %v819 = vpack.c.b16 %v623, %v621
        %v820 = vpack.c.b16 %v626, %v624
        %v821 = vpack.c.b16 %v627, %v625
        %v822 = vpack.c.b16 %v630, %v628
        %v823 = vpack.c.b16 %v631, %v629
        %v824 = vpack.c.b16 %v634, %v632
        %v825 = vpack.c.b16 %v635, %v633
        %v826 = vpack.c.b16 %v638, %v636
        %v827 = vpack.c.b16 %v639, %v637
        %v828 = vpack.c.b16 %v642, %v640
        %v829 = vpack.c.b16 %v643, %v641
        %v830 = vpack.c.b16 %v646, %v644
        %v831 = vpack.c.b16 %v647, %v645
        %v832 = vpack.c.b16 %v650, %v648
        %v833 = vpack.c.b16 %v651, %v649
        %v834 = vpack.c.b16 %v654, %v652
        %v835 = vpack.c.b16 %v655, %v653
        %v836 = vpack.c.b16 %v658, %v656
        %v837 = vpack.c.b16 %v659, %v657
        %v838 = vpack.c.b16 %v662, %v660
        %v839 = vpack.c.b16 %v663, %v661
        %v840 = vpack.c.b16 %v666, %v664
        %v841 = vpack.c.b16 %v667, %v665
        %v842 = vpack.c.b16 %v670, %v668
        %v843 = vpack.c.b16 %v671, %v669
        %v844 = vpack.c.b16 %v674, %v672
        %v845 = vpack.c.b16 %v675, %v673
        %v846 = vpack.c.b16 %v678, %v676
        %v847 = vpack.c.b16 %v679, %v677
        %v848 = vpack.c.b16 %v682, %v680
        %v849 = vpack.c.b16 %v683, %v681
        %v850 = vpack.c.b16 %v686, %v684
        %v851 = vpack.c.b16 %v687, %v685
        %v852 = vpack.c.b16 %v690, %v688
        %v853 = vpack.c.b16 %v691, %v689
        %v854 = vpack.c.b16 %v694, %v692
        %v855 = vpack.c.b16 %v695, %v693
        %v856 = vpack.c.b16 %v698, %v696
        %v857 = vpack.c.b16 %v699, %v697
        %v858 = vpack.c.b16 %v702, %v700
        %v859 = vpack.c.b16 %v703, %v701
        %v860 = vpack.c.b16 %v706, %v704
        %v861 = vpack.c.b16 %v707, %v705
        %v862 = vpack.c.b16 %v710, %v708
        %v863 = vpack.c.b16 %v711, %v709
        %v864 = vpack.c.b16 %v714, %v712
        %v865 = vpack.c.b16 %v715, %v713
        %v866 = vpack.c.b16 %v718, %v716
        %v867 = vpack.c.b16 %v719, %v717
        %v868 = vpack.c.b16 %v722, %v720
        %v869 = vpack.c.b16 %v723, %v721
        %v870 = vpack.c.b16 %v726, %v724
        %v871 = vpack.c.b16 %v727, %v725
        %v872 = vpack.c.b16 %v730, %v728
        %v873 = vpack.c.b16 %v731, %v729
        %v874 = vpack.c.b16 %v734, %v732
        %v875 = vpack.c.b16 %v735, %v733
        %v876 = vpack.c.b16 %v738, %v736
        %v877 = vpack.c.b16 %v739, %v737
        %v878 = vpack.c.b16 %v742, %v740
        %v879 = vpack.c.b16 %v743, %v741
        %v880 = vpack.c.b16 %v746, %v744
        %v881 = vpack.c.b16 %v747, %v745
        %v882 = vpack.c.b16 %v750, %v748
        %v883 = vpack.c.b16 %v751, %v749
        %v884 = vpack.c.b16 %v754, %v752
        %v885 = vpack.c.b16 %v755, %v753
        %v886 = vpack.c.b16 %v758, %v756
        %v887 = vpack.c.b16 %v759, %v757
        %v972 = vunpack.c.l.b16 %v349
        %v973 = vunpack.c.l.b16 %v350
        %v974 = vunpack.c.l.b16 %v351
        %v975 = vunpack.c.l.b16 %v352
        %v976 = vunpack.c.l.b16 %v353
        %v977 = vunpack.c.l.b16 %v354
        %v978 = vunpack.c.l.b16 %v355
        %v979 = vunpack.c.l.b16 %v356
        %v980 = vunpack.c.l.b16 %v357
        %v981 = vunpack.c.l.b16 %v358
        %v982 = vunpack.c.l.b16 %v359
        %v983 = vunpack.c.l.b16 %v360
        %v984 = vunpack.c.l.b16 %v361
        %v985 = vunpack.c.l.b16 %v362
        %v986 = vunpack.c.l.b16 %v363
        %v987 = vunpack.c.l.b16 %v364
        %v988 = vunpack.c.l.b16 %v365
        %v989 = vunpack.c.l.b16 %v366
        %v990 = vunpack.c.l.b16 %v367
        %v991 = vunpack.c.l.b16 %v368
        %v992 = vpack.c.b16 %v973, %v972
        %v993 = vpack.c.b16 %v975, %v974
        %v994 = vpack.c.b16 %v977, %v976
        %v995 = vpack.c.b16 %v979, %v978
        %v996 = vpack.c.b16 %v981, %v980
        %v997 = vpack.c.b16 %v983, %v982
        %v998 = vpack.c.b16 %v985, %v984
        %v999 = vpack.c.b16 %v987, %v986
        %v1000 = vpack.c.b16 %v989, %v988
        %v1001 = vpack.c.b16 %v991, %v990
        %vm1012 = vcmask 261120
        %v1014 = vsel %vm1012, %v761, 0
        %v1017 = vsel %vm1012, %v763, 0
        %v1020 = vsel %vm1012, %v765, 0
        %v1023 = vsel %vm1012, %v767, 0
        %v1026 = vsel %vm1012, %v769, 0
        %v1029 = vsel %vm1012, %v771, 0
        %v1032 = vsel %vm1012, %v773, 0
        %v1035 = vsel %vm1012, %v775, 0
        %v1038 = vsel %vm1012, %v777, 0
        %v1041 = vsel %vm1012, %v779, 0
        %v1044 = vsel %vm1012, %v781, 0
        %v1047 = vsel %vm1012, %v783, 0
        %v1050 = vsel %vm1012, %v785, 0
        %v1053 = vsel %vm1012, %v787, 0
        %v1056 = vsel %vm1012, %v789, 0
        %v1059 = vsel %vm1012, %v791, 0
        %v1062 = vsel %vm1012, %v793, 0
        %v1065 = vsel %vm1012, %v795, 0
        %v1068 = vsel %vm1012, %v797, 0
        %v1071 = vsel %vm1012, %v799, 0
        %v1074 = vsel %vm1012, %v801, 0
        %v1077 = vsel %vm1012, %v803, 0
        %v1080 = vsel %vm1012, %v805, 0
        %v1083 = vsel %vm1012, %v807, 0
        %v1086 = vsel %vm1012, %v809, 0
        %v1089 = vsel %vm1012, %v811, 0
        %v1092 = vsel %vm1012, %v813, 0
        %v1095 = vsel %vm1012, %v815, 0
        %v1098 = vsel %vm1012, %v817, 0
        %v1101 = vsel %vm1012, %v819, 0
        %v1104 = vsel %vm1012, %v821, 0
        %v1107 = vsel %vm1012, %v823, 0
        %v1110 = vsel %vm1012, %v825, 0
        %v1113 = vsel %vm1012, %v827, 0
        %v1116 = vsel %vm1012, %v829, 0
        %v1119 = vsel %vm1012, %v831, 0
        %v1122 = vsel %vm1012, %v833, 0
        %v1125 = vsel %vm1012, %v835, 0
        %v1128 = vsel %vm1012, %v837, 0
        %v1131 = vsel %vm1012, %v839, 0
        %v1134 = vsel %vm1012, %v841, 0
        %v1137 = vsel %vm1012, %v843, 0
        %v1140 = vsel %vm1012, %v845, 0
        %v1143 = vsel %vm1012, %v847, 0
        %v1146 = vsel %vm1012, %v849, 0
        %v1149 = vsel %vm1012, %v851, 0
        %v1152 = vsel %vm1012, %v853, 0
        %v1155 = vsel %vm1012, %v855, 0
        %v1158 = vsel %vm1012, %v857, 0
        %v1161 = vsel %vm1012, %v859, 0
        %v1164 = vsel %vm1012, %v861, 0
        %v1167 = vsel %vm1012, %v863, 0
        %v1170 = vsel %vm1012, %v865, 0
        %v1173 = vsel %vm1012, %v867, 0
        %v1176 = vsel %vm1012, %v869, 0
        %v1179 = vsel %vm1012, %v871, 0
        %v1182 = vsel %vm1012, %v873, 0
        %v1185 = vsel %vm1012, %v875, 0
        %v1188 = vsel %vm1012, %v877, 0
        %v1191 = vsel %vm1012, %v879, 0
        %v1194 = vsel %vm1012, %v881, 0
        %v1197 = vsel %vm1012, %v883, 0
        %v1200 = vsel %vm1012, %v885, 0
        %v1203 = vsel %vm1012, %v887, 0
        %1205 = vmatprep.subr.bf16.mxu0 0
        %1206 = vmatpush1.bf16.msra.mxu0 %v999
        %1207 = vmatprep.subr.bf16.mxu0 0
        %1208 = vmatpush1.bf16.msra.mxu0 %v998
        %1209 = vmatprep.subr.bf16.mxu0 0
        %1210 = vmatpush1.bf16.msra.mxu0 %v997
        %1211 = vmatprep.subr.bf16.mxu0 0
        %1212 = vmatpush1.bf16.msra.mxu0 %v996
        %1213 = vmatprep.subr.bf16.mxu0 0
        %1214 = vmatpush1.bf16.msra.mxu0 %v995
        %1215 = vmatprep.subr.bf16.mxu0 0
        %1216 = vmatpush1.bf16.msra.mxu0 %v994
        %1217 = vmatprep.subr.bf16.mxu0 0
        %1218 = vmatpush1.bf16.msra.mxu0 %v993
        %1219 = vmatprep.subr.bf16.mxu0 0
        %1220 = vmatpush1.bf16.msra.mxu0 %v992
        %1221 = vmatprep.subr.bf16.mxu0 0
        %1222 = vmatpush2.bf16.msra.mxu0 0
        %1223 = vmatprep.subr.bf16.mxu0 0
        %1224 = vmatpush2.bf16.msra.mxu0 0
        %1225 = vmatprep.subr.bf16.mxu0 0
        %1226 = vmatpush2.bf16.msra.mxu0 0
        %1227 = vmatprep.subr.bf16.mxu0 0
        %1228 = vmatpush2.bf16.msra.mxu0 0
        %1229 = vmatprep.subr.bf16.mxu0 0
        %1230 = vmatpush2.bf16.msra.mxu0 0
        %1231 = vmatprep.subr.bf16.mxu0 0
        %1232 = vmatpush2.bf16.msra.mxu0 0
        %1233 = vmatprep.subr.bf16.mxu0 0
        %1234 = vmatpush2.bf16.msra.mxu0 %v1001
        %1235 = vmatprep.subr.bf16.mxu0 0
        %1236 = vmatpush2.bf16.msra.mxu0 %v1000
        %1237 = vmatprep.mubr.bf16.mxu0 %v1014
        %1238 = vmatmul.mubr.bf16.gmra.mxu0 %v760
        %v1239 = vpop.f32.mrf.mxu0
        %v1240 = vadd.f32 %v374, %v1239
        %v1241 = vpop.f32.mrf.mxu0
        %v1242 = vpop.f32.mrf.mxu0
        %v1243 = vadd.f32 %v374, %v1242
        %v1244 = vpop.f32.mrf.mxu0
        %1245 = vmatprep.mubr.bf16.mxu0 %v1017
        %1246 = vmatmul.mubr.bf16.gmra.mxu0 %v762
        %v1247 = vpop.f32.mrf.mxu0
        %v1248 = vadd.f32 %v374, %v1247
        %v1249 = vpop.f32.mrf.mxu0
        %v1250 = vpop.f32.mrf.mxu0
        %v1251 = vadd.f32 %v374, %v1250
        %v1252 = vpop.f32.mrf.mxu0
        %1253 = vmatprep.mubr.bf16.mxu0 %v1020
        %1254 = vmatmul.mubr.bf16.gmra.mxu0 %v764
        %v1255 = vpop.f32.mrf.mxu0
        %v1256 = vadd.f32 %v374, %v1255
        %v1257 = vpop.f32.mrf.mxu0
        %v1258 = vpop.f32.mrf.mxu0
        %v1259 = vadd.f32 %v374, %v1258
        %v1260 = vpop.f32.mrf.mxu0
        %1261 = vmatprep.mubr.bf16.mxu0 %v1023
        %1262 = vmatmul.mubr.bf16.gmra.mxu0 %v766
        %v1263 = vpop.f32.mrf.mxu0
        %v1264 = vadd.f32 %v374, %v1263
        %v1265 = vpop.f32.mrf.mxu0
        %v1266 = vpop.f32.mrf.mxu0
        %v1267 = vadd.f32 %v374, %v1266
        %v1268 = vpop.f32.mrf.mxu0
        %1269 = vmatprep.mubr.bf16.mxu0 %v1026
        %1270 = vmatmul.mubr.bf16.gmra.mxu0 %v768
        %v1271 = vpop.f32.mrf.mxu0
        %v1272 = vadd.f32 %v374, %v1271
        %v1273 = vpop.f32.mrf.mxu0
        %v1274 = vpop.f32.mrf.mxu0
        %v1275 = vadd.f32 %v374, %v1274
        %v1276 = vpop.f32.mrf.mxu0
        %1277 = vmatprep.mubr.bf16.mxu0 %v1029
        %1278 = vmatmul.mubr.bf16.gmra.mxu0 %v770
        %v1279 = vpop.f32.mrf.mxu0
        %v1280 = vadd.f32 %v374, %v1279
        %v1281 = vpop.f32.mrf.mxu0
        %v1282 = vpop.f32.mrf.mxu0
        %v1283 = vadd.f32 %v374, %v1282
        %v1284 = vpop.f32.mrf.mxu0
        %1285 = vmatprep.mubr.bf16.mxu0 %v1032
        %1286 = vmatmul.mubr.bf16.gmra.mxu0 %v772
        %v1287 = vpop.f32.mrf.mxu0
        %v1288 = vadd.f32 %v374, %v1287
        %v1289 = vpop.f32.mrf.mxu0
        %v1290 = vpop.f32.mrf.mxu0
        %v1291 = vadd.f32 %v374, %v1290
        %v1292 = vpop.f32.mrf.mxu0
        %1293 = vmatprep.mubr.bf16.mxu0 %v1035
        %1294 = vmatmul.mubr.bf16.gmra.mxu0 %v774
        %v1295 = vpop.f32.mrf.mxu0
        %v1296 = vadd.f32 %v374, %v1295
        %v1297 = vpop.f32.mrf.mxu0
        %v1298 = vpop.f32.mrf.mxu0
        %v1299 = vadd.f32 %v374, %v1298
        %v1300 = vpop.f32.mrf.mxu0
        %1301 = vmatprep.mubr.bf16.mxu0 %v1038
        %1302 = vmatmul.mubr.bf16.gmra.mxu0 %v776
        %v1303 = vpop.f32.mrf.mxu0
        %v1304 = vadd.f32 %v374, %v1303
        %v1305 = vpop.f32.mrf.mxu0
        %v1306 = vpop.f32.mrf.mxu0
        %v1307 = vadd.f32 %v374, %v1306
        %v1308 = vpop.f32.mrf.mxu0
        %1309 = vmatprep.mubr.bf16.mxu0 %v1041
        %1310 = vmatmul.mubr.bf16.gmra.mxu0 %v778
        %v1311 = vpop.f32.mrf.mxu0
        %v1312 = vadd.f32 %v374, %v1311
        %v1313 = vpop.f32.mrf.mxu0
        %v1314 = vpop.f32.mrf.mxu0
        %v1315 = vadd.f32 %v374, %v1314
        %v1316 = vpop.f32.mrf.mxu0
        %1317 = vmatprep.mubr.bf16.mxu0 %v1044
        %1318 = vmatmul.mubr.bf16.gmra.mxu0 %v780
        %v1319 = vpop.f32.mrf.mxu0
        %v1320 = vadd.f32 %v374, %v1319
        %v1321 = vpop.f32.mrf.mxu0
        %v1322 = vpop.f32.mrf.mxu0
        %v1323 = vadd.f32 %v374, %v1322
        %v1324 = vpop.f32.mrf.mxu0
        %1325 = vmatprep.mubr.bf16.mxu0 %v1047
        %1326 = vmatmul.mubr.bf16.gmra.mxu0 %v782
        %v1327 = vpop.f32.mrf.mxu0
        %v1328 = vadd.f32 %v374, %v1327
        %v1329 = vpop.f32.mrf.mxu0
        %v1330 = vpop.f32.mrf.mxu0
        %v1331 = vadd.f32 %v374, %v1330
        %v1332 = vpop.f32.mrf.mxu0
        %1333 = vmatprep.mubr.bf16.mxu0 %v1050
        %1334 = vmatmul.mubr.bf16.gmra.mxu0 %v784
        %v1335 = vpop.f32.mrf.mxu0
        %v1336 = vadd.f32 %v374, %v1335
        %v1337 = vpop.f32.mrf.mxu0
        %v1338 = vpop.f32.mrf.mxu0
        %v1339 = vadd.f32 %v374, %v1338
        %v1340 = vpop.f32.mrf.mxu0
        %1341 = vmatprep.mubr.bf16.mxu0 %v1053
        %1342 = vmatmul.mubr.bf16.gmra.mxu0 %v786
        %v1343 = vpop.f32.mrf.mxu0
        %v1344 = vadd.f32 %v374, %v1343
        %v1345 = vpop.f32.mrf.mxu0
        %v1346 = vpop.f32.mrf.mxu0
        %v1347 = vadd.f32 %v374, %v1346
        %v1348 = vpop.f32.mrf.mxu0
        %1349 = vmatprep.mubr.bf16.mxu0 %v1056
        %1350 = vmatmul.mubr.bf16.gmra.mxu0 %v788
        %v1351 = vpop.f32.mrf.mxu0
        %v1352 = vadd.f32 %v374, %v1351
        %v1353 = vpop.f32.mrf.mxu0
        %v1354 = vpop.f32.mrf.mxu0
        %v1355 = vadd.f32 %v374, %v1354
        %v1356 = vpop.f32.mrf.mxu0
        %1357 = vmatprep.mubr.bf16.mxu0 %v1059
        %1358 = vmatmul.mubr.bf16.gmra.mxu0 %v790
        %v1359 = vpop.f32.mrf.mxu0
        %v1360 = vadd.f32 %v374, %v1359
        %v1361 = vpop.f32.mrf.mxu0
        %v1362 = vpop.f32.mrf.mxu0
        %v1363 = vadd.f32 %v374, %v1362
        %v1364 = vpop.f32.mrf.mxu0
        %1365 = vmatprep.mubr.bf16.mxu0 %v1062
        %1366 = vmatmul.mubr.bf16.gmra.mxu0 %v792
        %v1367 = vpop.f32.mrf.mxu0
        %v1368 = vadd.f32 %v374, %v1367
        %v1369 = vpop.f32.mrf.mxu0
        %v1370 = vpop.f32.mrf.mxu0
        %v1371 = vadd.f32 %v374, %v1370
        %v1372 = vpop.f32.mrf.mxu0
        %1373 = vmatprep.mubr.bf16.mxu0 %v1065
        %1374 = vmatmul.mubr.bf16.gmra.mxu0 %v794
        %v1375 = vpop.f32.mrf.mxu0
        %v1376 = vadd.f32 %v374, %v1375
        %v1377 = vpop.f32.mrf.mxu0
        %v1378 = vpop.f32.mrf.mxu0
        %v1379 = vadd.f32 %v374, %v1378
        %v1380 = vpop.f32.mrf.mxu0
        %1381 = vmatprep.mubr.bf16.mxu0 %v1068
        %1382 = vmatmul.mubr.bf16.gmra.mxu0 %v796
        %v1383 = vpop.f32.mrf.mxu0
        %v1384 = vadd.f32 %v374, %v1383
        %v1385 = vpop.f32.mrf.mxu0
        %v1386 = vpop.f32.mrf.mxu0
        %v1387 = vadd.f32 %v374, %v1386
        %v1388 = vpop.f32.mrf.mxu0
        %1389 = vmatprep.mubr.bf16.mxu0 %v1071
        %1390 = vmatmul.mubr.bf16.gmra.mxu0 %v798
        %v1391 = vpop.f32.mrf.mxu0
        %v1392 = vadd.f32 %v374, %v1391
        %v1393 = vpop.f32.mrf.mxu0
        %v1394 = vpop.f32.mrf.mxu0
        %v1395 = vadd.f32 %v374, %v1394
        %v1396 = vpop.f32.mrf.mxu0
        %1397 = vmatprep.mubr.bf16.mxu0 %v1074
        %1398 = vmatmul.mubr.bf16.gmra.mxu0 %v800
        %v1399 = vpop.f32.mrf.mxu0
        %v1400 = vadd.f32 %v374, %v1399
        %v1401 = vpop.f32.mrf.mxu0
        %v1402 = vpop.f32.mrf.mxu0
        %v1403 = vadd.f32 %v374, %v1402
        %v1404 = vpop.f32.mrf.mxu0
        %1405 = vmatprep.mubr.bf16.mxu0 %v1077
        %1406 = vmatmul.mubr.bf16.gmra.mxu0 %v802
        %v1407 = vpop.f32.mrf.mxu0
        %v1408 = vadd.f32 %v374, %v1407
        %v1409 = vpop.f32.mrf.mxu0
        %v1410 = vpop.f32.mrf.mxu0
        %v1411 = vadd.f32 %v374, %v1410
        %v1412 = vpop.f32.mrf.mxu0
        %1413 = vmatprep.mubr.bf16.mxu0 %v1080
        %1414 = vmatmul.mubr.bf16.gmra.mxu0 %v804
        %v1415 = vpop.f32.mrf.mxu0
        %v1416 = vadd.f32 %v374, %v1415
        %v1417 = vpop.f32.mrf.mxu0
        %v1418 = vpop.f32.mrf.mxu0
        %v1419 = vadd.f32 %v374, %v1418
        %v1420 = vpop.f32.mrf.mxu0
        %1421 = vmatprep.mubr.bf16.mxu0 %v1083
        %1422 = vmatmul.mubr.bf16.gmra.mxu0 %v806
        %v1423 = vpop.f32.mrf.mxu0
        %v1424 = vadd.f32 %v374, %v1423
        %v1425 = vpop.f32.mrf.mxu0
        %v1426 = vpop.f32.mrf.mxu0
        %v1427 = vadd.f32 %v374, %v1426
        %v1428 = vpop.f32.mrf.mxu0
        %1429 = vmatprep.mubr.bf16.mxu0 %v1086
        %1430 = vmatmul.mubr.bf16.gmra.mxu0 %v808
        %v1431 = vpop.f32.mrf.mxu0
        %v1432 = vadd.f32 %v374, %v1431
        %v1433 = vpop.f32.mrf.mxu0
        %v1434 = vpop.f32.mrf.mxu0
        %v1435 = vadd.f32 %v374, %v1434
        %v1436 = vpop.f32.mrf.mxu0
        %1437 = vmatprep.mubr.bf16.mxu0 %v1089
        %1438 = vmatmul.mubr.bf16.gmra.mxu0 %v810
        %v1439 = vpop.f32.mrf.mxu0
        %v1440 = vadd.f32 %v374, %v1439
        %v1441 = vpop.f32.mrf.mxu0
        %v1442 = vpop.f32.mrf.mxu0
        %v1443 = vadd.f32 %v374, %v1442
        %v1444 = vpop.f32.mrf.mxu0
        %1445 = vmatprep.mubr.bf16.mxu0 %v1092
        %1446 = vmatmul.mubr.bf16.gmra.mxu0 %v812
        %v1447 = vpop.f32.mrf.mxu0
        %v1448 = vadd.f32 %v374, %v1447
        %v1449 = vpop.f32.mrf.mxu0
        %v1450 = vpop.f32.mrf.mxu0
        %v1451 = vadd.f32 %v374, %v1450
        %v1452 = vpop.f32.mrf.mxu0
        %1453 = vmatprep.mubr.bf16.mxu0 %v1095
        %1454 = vmatmul.mubr.bf16.gmra.mxu0 %v814
        %v1455 = vpop.f32.mrf.mxu0
        %v1456 = vadd.f32 %v374, %v1455
        %v1457 = vpop.f32.mrf.mxu0
        %v1458 = vpop.f32.mrf.mxu0
        %v1459 = vadd.f32 %v374, %v1458
        %v1460 = vpop.f32.mrf.mxu0
        %1461 = vmatprep.mubr.bf16.mxu0 %v1098
        %1462 = vmatmul.mubr.bf16.gmra.mxu0 %v816
        %v1463 = vpop.f32.mrf.mxu0
        %v1464 = vadd.f32 %v374, %v1463
        %v1465 = vpop.f32.mrf.mxu0
        %v1466 = vpop.f32.mrf.mxu0
        %v1467 = vadd.f32 %v374, %v1466
        %v1468 = vpop.f32.mrf.mxu0
        %1469 = vmatprep.mubr.bf16.mxu0 %v1101
        %1470 = vmatmul.mubr.bf16.gmra.mxu0 %v818
        %v1471 = vpop.f32.mrf.mxu0
        %v1472 = vadd.f32 %v374, %v1471
        %v1473 = vpop.f32.mrf.mxu0
        %v1474 = vpop.f32.mrf.mxu0
        %v1475 = vadd.f32 %v374, %v1474
        %v1476 = vpop.f32.mrf.mxu0
        %1477 = vmatprep.mubr.bf16.mxu0 %v1104
        %1478 = vmatmul.mubr.bf16.gmra.mxu0 %v820
        %v1479 = vpop.f32.mrf.mxu0
        %v1480 = vadd.f32 %v374, %v1479
        %v1481 = vpop.f32.mrf.mxu0
        %v1482 = vpop.f32.mrf.mxu0
        %v1483 = vadd.f32 %v374, %v1482
        %v1484 = vpop.f32.mrf.mxu0
        %1485 = vmatprep.mubr.bf16.mxu0 %v1107
        %1486 = vmatmul.mubr.bf16.gmra.mxu0 %v822
        %v1487 = vpop.f32.mrf.mxu0
        %v1488 = vadd.f32 %v374, %v1487
        %v1489 = vpop.f32.mrf.mxu0
        %v1490 = vpop.f32.mrf.mxu0
        %v1491 = vadd.f32 %v374, %v1490
        %v1492 = vpop.f32.mrf.mxu0
        %1493 = vmatprep.mubr.bf16.mxu0 %v1110
        %1494 = vmatmul.mubr.bf16.gmra.mxu0 %v824
        %v1495 = vpop.f32.mrf.mxu0
        %v1496 = vadd.f32 %v374, %v1495
        %v1497 = vpop.f32.mrf.mxu0
        %v1498 = vpop.f32.mrf.mxu0
        %v1499 = vadd.f32 %v374, %v1498
        %v1500 = vpop.f32.mrf.mxu0
        %1501 = vmatprep.mubr.bf16.mxu0 %v1113
        %1502 = vmatmul.mubr.bf16.gmra.mxu0 %v826
        %v1503 = vpop.f32.mrf.mxu0
        %v1504 = vadd.f32 %v374, %v1503
        %v1505 = vpop.f32.mrf.mxu0
        %v1506 = vpop.f32.mrf.mxu0
        %v1507 = vadd.f32 %v374, %v1506
        %v1508 = vpop.f32.mrf.mxu0
        %1509 = vmatprep.mubr.bf16.mxu0 %v1116
        %1510 = vmatmul.mubr.bf16.gmra.mxu0 %v828
        %v1511 = vpop.f32.mrf.mxu0
        %v1512 = vadd.f32 %v374, %v1511
        %v1513 = vpop.f32.mrf.mxu0
        %v1514 = vpop.f32.mrf.mxu0
        %v1515 = vadd.f32 %v374, %v1514
        %v1516 = vpop.f32.mrf.mxu0
        %1517 = vmatprep.mubr.bf16.mxu0 %v1119
        %1518 = vmatmul.mubr.bf16.gmra.mxu0 %v830
        %v1519 = vpop.f32.mrf.mxu0
        %v1520 = vadd.f32 %v374, %v1519
        %v1521 = vpop.f32.mrf.mxu0
        %v1522 = vpop.f32.mrf.mxu0
        %v1523 = vadd.f32 %v374, %v1522
        %v1524 = vpop.f32.mrf.mxu0
        %1525 = vmatprep.mubr.bf16.mxu0 %v1122
        %1526 = vmatmul.mubr.bf16.gmra.mxu0 %v832
        %v1527 = vpop.f32.mrf.mxu0
        %v1528 = vadd.f32 %v374, %v1527
        %v1529 = vpop.f32.mrf.mxu0
        %v1530 = vpop.f32.mrf.mxu0
        %v1531 = vadd.f32 %v374, %v1530
        %v1532 = vpop.f32.mrf.mxu0
        %1533 = vmatprep.mubr.bf16.mxu0 %v1125
        %1534 = vmatmul.mubr.bf16.gmra.mxu0 %v834
        %v1535 = vpop.f32.mrf.mxu0
        %v1536 = vadd.f32 %v374, %v1535
        %v1537 = vpop.f32.mrf.mxu0
        %v1538 = vpop.f32.mrf.mxu0
        %v1539 = vadd.f32 %v374, %v1538
        %v1540 = vpop.f32.mrf.mxu0
        %1541 = vmatprep.mubr.bf16.mxu0 %v1128
        %1542 = vmatmul.mubr.bf16.gmra.mxu0 %v836
        %v1543 = vpop.f32.mrf.mxu0
        %v1544 = vadd.f32 %v374, %v1543
        %v1545 = vpop.f32.mrf.mxu0
        %v1546 = vpop.f32.mrf.mxu0
        %v1547 = vadd.f32 %v374, %v1546
        %v1548 = vpop.f32.mrf.mxu0
        %1549 = vmatprep.mubr.bf16.mxu0 %v1131
        %1550 = vmatmul.mubr.bf16.gmra.mxu0 %v838
        %v1551 = vpop.f32.mrf.mxu0
        %v1552 = vadd.f32 %v374, %v1551
        %v1553 = vpop.f32.mrf.mxu0
        %v1554 = vpop.f32.mrf.mxu0
        %v1555 = vadd.f32 %v374, %v1554
        %v1556 = vpop.f32.mrf.mxu0
        %1557 = vmatprep.mubr.bf16.mxu0 %v1134
        %1558 = vmatmul.mubr.bf16.gmra.mxu0 %v840
        %v1559 = vpop.f32.mrf.mxu0
        %v1560 = vadd.f32 %v374, %v1559
        %v1561 = vpop.f32.mrf.mxu0
        %v1562 = vpop.f32.mrf.mxu0
        %v1563 = vadd.f32 %v374, %v1562
        %v1564 = vpop.f32.mrf.mxu0
        %1565 = vmatprep.mubr.bf16.mxu0 %v1137
        %1566 = vmatmul.mubr.bf16.gmra.mxu0 %v842
        %v1567 = vpop.f32.mrf.mxu0
        %v1568 = vadd.f32 %v374, %v1567
        %v1569 = vpop.f32.mrf.mxu0
        %v1570 = vpop.f32.mrf.mxu0
        %v1571 = vadd.f32 %v374, %v1570
        %v1572 = vpop.f32.mrf.mxu0
        %1573 = vmatprep.mubr.bf16.mxu0 %v1140
        %1574 = vmatmul.mubr.bf16.gmra.mxu0 %v844
        %v1575 = vpop.f32.mrf.mxu0
        %v1576 = vadd.f32 %v374, %v1575
        %v1577 = vpop.f32.mrf.mxu0
        %v1578 = vpop.f32.mrf.mxu0
        %v1579 = vadd.f32 %v374, %v1578
        %v1580 = vpop.f32.mrf.mxu0
        %1581 = vmatprep.mubr.bf16.mxu0 %v1143
        %1582 = vmatmul.mubr.bf16.gmra.mxu0 %v846
        %v1583 = vpop.f32.mrf.mxu0
        %v1584 = vadd.f32 %v374, %v1583
        %v1585 = vpop.f32.mrf.mxu0
        %v1586 = vpop.f32.mrf.mxu0
        %v1587 = vadd.f32 %v374, %v1586
        %v1588 = vpop.f32.mrf.mxu0
        %1589 = vmatprep.mubr.bf16.mxu0 %v1146
        %1590 = vmatmul.mubr.bf16.gmra.mxu0 %v848
        %v1591 = vpop.f32.mrf.mxu0
        %v1592 = vadd.f32 %v374, %v1591
        %v1593 = vpop.f32.mrf.mxu0
        %v1594 = vpop.f32.mrf.mxu0
        %v1595 = vadd.f32 %v374, %v1594
        %v1596 = vpop.f32.mrf.mxu0
        %1597 = vmatprep.mubr.bf16.mxu0 %v1149
        %1598 = vmatmul.mubr.bf16.gmra.mxu0 %v850
        %v1599 = vpop.f32.mrf.mxu0
        %v1600 = vadd.f32 %v374, %v1599
        %v1601 = vpop.f32.mrf.mxu0
        %v1602 = vpop.f32.mrf.mxu0
        %v1603 = vadd.f32 %v374, %v1602
        %v1604 = vpop.f32.mrf.mxu0
        %1605 = vmatprep.mubr.bf16.mxu0 %v1152
        %1606 = vmatmul.mubr.bf16.gmra.mxu0 %v852
        %v1607 = vpop.f32.mrf.mxu0
        %v1608 = vadd.f32 %v374, %v1607
        %v1609 = vpop.f32.mrf.mxu0
        %v1610 = vpop.f32.mrf.mxu0
        %v1611 = vadd.f32 %v374, %v1610
        %v1612 = vpop.f32.mrf.mxu0
        %1613 = vmatprep.mubr.bf16.mxu0 %v1155
        %1614 = vmatmul.mubr.bf16.gmra.mxu0 %v854
        %v1615 = vpop.f32.mrf.mxu0
        %v1616 = vadd.f32 %v374, %v1615
        %v1617 = vpop.f32.mrf.mxu0
        %v1618 = vpop.f32.mrf.mxu0
        %v1619 = vadd.f32 %v374, %v1618
        %v1620 = vpop.f32.mrf.mxu0
        %1621 = vmatprep.mubr.bf16.mxu0 %v1158
        %1622 = vmatmul.mubr.bf16.gmra.mxu0 %v856
        %v1623 = vpop.f32.mrf.mxu0
        %v1624 = vadd.f32 %v374, %v1623
        %v1625 = vpop.f32.mrf.mxu0
        %v1626 = vpop.f32.mrf.mxu0
        %v1627 = vadd.f32 %v374, %v1626
        %v1628 = vpop.f32.mrf.mxu0
        %1629 = vmatprep.mubr.bf16.mxu0 %v1161
        %1630 = vmatmul.mubr.bf16.gmra.mxu0 %v858
        %v1631 = vpop.f32.mrf.mxu0
        %v1632 = vadd.f32 %v374, %v1631
        %v1633 = vpop.f32.mrf.mxu0
        %v1634 = vpop.f32.mrf.mxu0
        %v1635 = vadd.f32 %v374, %v1634
        %v1636 = vpop.f32.mrf.mxu0
        %1637 = vmatprep.mubr.bf16.mxu0 %v1164
        %1638 = vmatmul.mubr.bf16.gmra.mxu0 %v860
        %v1639 = vpop.f32.mrf.mxu0
        %v1640 = vadd.f32 %v374, %v1639
        %v1641 = vpop.f32.mrf.mxu0
        %v1642 = vpop.f32.mrf.mxu0
        %v1643 = vadd.f32 %v374, %v1642
        %v1644 = vpop.f32.mrf.mxu0
        %1645 = vmatprep.mubr.bf16.mxu0 %v1167
        %1646 = vmatmul.mubr.bf16.gmra.mxu0 %v862
        %v1647 = vpop.f32.mrf.mxu0
        %v1648 = vadd.f32 %v374, %v1647
        %v1649 = vpop.f32.mrf.mxu0
        %v1650 = vpop.f32.mrf.mxu0
        %v1651 = vadd.f32 %v374, %v1650
        %v1652 = vpop.f32.mrf.mxu0
        %1653 = vmatprep.mubr.bf16.mxu0 %v1170
        %1654 = vmatmul.mubr.bf16.gmra.mxu0 %v864
        %v1655 = vpop.f32.mrf.mxu0
        %v1656 = vadd.f32 %v374, %v1655
        %v1657 = vpop.f32.mrf.mxu0
        %v1658 = vpop.f32.mrf.mxu0
        %v1659 = vadd.f32 %v374, %v1658
        %v1660 = vpop.f32.mrf.mxu0
        %1661 = vmatprep.mubr.bf16.mxu0 %v1173
        %1662 = vmatmul.mubr.bf16.gmra.mxu0 %v866
        %v1663 = vpop.f32.mrf.mxu0
        %v1664 = vadd.f32 %v374, %v1663
        %v1665 = vpop.f32.mrf.mxu0
        %v1666 = vpop.f32.mrf.mxu0
        %v1667 = vadd.f32 %v374, %v1666
        %v1668 = vpop.f32.mrf.mxu0
        %1669 = vmatprep.mubr.bf16.mxu0 %v1176
        %1670 = vmatmul.mubr.bf16.gmra.mxu0 %v868
        %v1671 = vpop.f32.mrf.mxu0
        %v1672 = vadd.f32 %v374, %v1671
        %v1673 = vpop.f32.mrf.mxu0
        %v1674 = vpop.f32.mrf.mxu0
        %v1675 = vadd.f32 %v374, %v1674
        %v1676 = vpop.f32.mrf.mxu0
        %1677 = vmatprep.mubr.bf16.mxu0 %v1179
        %1678 = vmatmul.mubr.bf16.gmra.mxu0 %v870
        %v1679 = vpop.f32.mrf.mxu0
        %v1680 = vadd.f32 %v374, %v1679
        %v1681 = vpop.f32.mrf.mxu0
        %v1682 = vpop.f32.mrf.mxu0
        %v1683 = vadd.f32 %v374, %v1682
        %v1684 = vpop.f32.mrf.mxu0
        %1685 = vmatprep.mubr.bf16.mxu0 %v1182
        %1686 = vmatmul.mubr.bf16.gmra.mxu0 %v872
        %v1687 = vpop.f32.mrf.mxu0
        %v1688 = vadd.f32 %v374, %v1687
        %v1689 = vpop.f32.mrf.mxu0
        %v1690 = vpop.f32.mrf.mxu0
        %v1691 = vadd.f32 %v374, %v1690
        %v1692 = vpop.f32.mrf.mxu0
        %1693 = vmatprep.mubr.bf16.mxu0 %v1185
        %1694 = vmatmul.mubr.bf16.gmra.mxu0 %v874
        %v1695 = vpop.f32.mrf.mxu0
        %v1696 = vadd.f32 %v374, %v1695
        %v1697 = vpop.f32.mrf.mxu0
        %v1698 = vpop.f32.mrf.mxu0
        %v1699 = vadd.f32 %v374, %v1698
        %v1700 = vpop.f32.mrf.mxu0
        %1701 = vmatprep.mubr.bf16.mxu0 %v1188
        %1702 = vmatmul.mubr.bf16.gmra.mxu0 %v876
        %v1703 = vpop.f32.mrf.mxu0
        %v1704 = vadd.f32 %v374, %v1703
        %v1705 = vpop.f32.mrf.mxu0
        %v1706 = vpop.f32.mrf.mxu0
        %v1707 = vadd.f32 %v374, %v1706
        %v1708 = vpop.f32.mrf.mxu0
        %1709 = vmatprep.mubr.bf16.mxu0 %v1191
        %1710 = vmatmul.mubr.bf16.gmra.mxu0 %v878
        %v1711 = vpop.f32.mrf.mxu0
        %v1712 = vadd.f32 %v374, %v1711
        %v1713 = vpop.f32.mrf.mxu0
        %v1714 = vpop.f32.mrf.mxu0
        %v1715 = vadd.f32 %v374, %v1714
        %v1716 = vpop.f32.mrf.mxu0
        %1717 = vmatprep.mubr.bf16.mxu0 %v1194
        %1718 = vmatmul.mubr.bf16.gmra.mxu0 %v880
        %v1719 = vpop.f32.mrf.mxu0
        %v1720 = vadd.f32 %v374, %v1719
        %v1721 = vpop.f32.mrf.mxu0
        %v1722 = vpop.f32.mrf.mxu0
        %v1723 = vadd.f32 %v374, %v1722
        %v1724 = vpop.f32.mrf.mxu0
        %1725 = vmatprep.mubr.bf16.mxu0 %v1197
        %1726 = vmatmul.mubr.bf16.gmra.mxu0 %v882
        %v1727 = vpop.f32.mrf.mxu0
        %v1728 = vadd.f32 %v374, %v1727
        %v1729 = vpop.f32.mrf.mxu0
        %v1730 = vpop.f32.mrf.mxu0
        %v1731 = vadd.f32 %v374, %v1730
        %v1732 = vpop.f32.mrf.mxu0
        %1733 = vmatprep.mubr.bf16.mxu0 %v1200
        %1734 = vmatmul.mubr.bf16.gmra.mxu0 %v884
        %v1735 = vpop.f32.mrf.mxu0
        %v1736 = vadd.f32 %v374, %v1735
        %v1737 = vpop.f32.mrf.mxu0
        %v1738 = vpop.f32.mrf.mxu0
        %v1739 = vadd.f32 %v374, %v1738
        %v1740 = vpop.f32.mrf.mxu0
        %1741 = vmatprep.mubr.bf16.mxu0 %v1203
        %1742 = vmatmul.mubr.bf16.gmra.mxu0 %v886
        %v1743 = vpop.f32.mrf.mxu0
        %v1744 = vadd.f32 %v374, %v1743
        %v1745 = vpop.f32.mrf.mxu0
        %v1746 = vpop.f32.mrf.mxu0
        %v1747 = vadd.f32 %v374, %v1746
        %v1748 = vpop.f32.mrf.mxu0
        %1749 = vdwg.mxu0
        %v1750 = vmax.f32 %v1240, 0.0
        %v1751 = vmax.f32 %v1243, 0.0
        %v1752 = vmax.f32 %v1248, 0.0
        %v1753 = vmax.f32 %v1251, 0.0
        %v1754 = vmax.f32 %v1256, 0.0
        %v1755 = vmax.f32 %v1259, 0.0
        %v1756 = vmax.f32 %v1264, 0.0
        %v1757 = vmax.f32 %v1267, 0.0
        %v1758 = vmax.f32 %v1272, 0.0
        %v1759 = vmax.f32 %v1275, 0.0
        %v1760 = vmax.f32 %v1280, 0.0
        %v1761 = vmax.f32 %v1283, 0.0
        %v1762 = vmax.f32 %v1288, 0.0
        %v1763 = vmax.f32 %v1291, 0.0
        %v1764 = vmax.f32 %v1296, 0.0
        %v1765 = vmax.f32 %v1299, 0.0
        %v1766 = vmax.f32 %v1304, 0.0
        %v1767 = vmax.f32 %v1307, 0.0
        %v1768 = vmax.f32 %v1312, 0.0
        %v1769 = vmax.f32 %v1315, 0.0
        %v1770 = vmax.f32 %v1320, 0.0
        %v1771 = vmax.f32 %v1323, 0.0
        %v1772 = vmax.f32 %v1328, 0.0
        %v1773 = vmax.f32 %v1331, 0.0
        %v1774 = vmax.f32 %v1336, 0.0
        %v1775 = vmax.f32 %v1339, 0.0
        %v1776 = vmax.f32 %v1344, 0.0
        %v1777 = vmax.f32 %v1347, 0.0
        %v1778 = vmax.f32 %v1352, 0.0
        %v1779 = vmax.f32 %v1355, 0.0
        %v1780 = vmax.f32 %v1360, 0.0
        %v1781 = vmax.f32 %v1363, 0.0
        %v1782 = vmax.f32 %v1368, 0.0
        %v1783 = vmax.f32 %v1371, 0.0
        %v1784 = vmax.f32 %v1376, 0.0
        %v1785 = vmax.f32 %v1379, 0.0
        %v1786 = vmax.f32 %v1384, 0.0
        %v1787 = vmax.f32 %v1387, 0.0
        %v1788 = vmax.f32 %v1392, 0.0
        %v1789 = vmax.f32 %v1395, 0.0
        %v1790 = vmax.f32 %v1400, 0.0
        %v1791 = vmax.f32 %v1403, 0.0
        %v1792 = vmax.f32 %v1408, 0.0
        %v1793 = vmax.f32 %v1411, 0.0
        %v1794 = vmax.f32 %v1416, 0.0
        %v1795 = vmax.f32 %v1419, 0.0
        %v1796 = vmax.f32 %v1424, 0.0
        %v1797 = vmax.f32 %v1427, 0.0
        %v1798 = vmax.f32 %v1432, 0.0
        %v1799 = vmax.f32 %v1435, 0.0
        %v1800 = vmax.f32 %v1440, 0.0
        %v1801 = vmax.f32 %v1443, 0.0
        %v1802 = vmax.f32 %v1448, 0.0
        %v1803 = vmax.f32 %v1451, 0.0
        %v1804 = vmax.f32 %v1456, 0.0
        %v1805 = vmax.f32 %v1459, 0.0
        %v1806 = vmax.f32 %v1464, 0.0
        %v1807 = vmax.f32 %v1467, 0.0
        %v1808 = vmax.f32 %v1472, 0.0
        %v1809 = vmax.f32 %v1475, 0.0
        %v1810 = vmax.f32 %v1480, 0.0
        %v1811 = vmax.f32 %v1483, 0.0
        %v1812 = vmax.f32 %v1488, 0.0
        %v1813 = vmax.f32 %v1491, 0.0
        %v1814 = vmax.f32 %v1496, 0.0
        %v1815 = vmax.f32 %v1499, 0.0
        %v1816 = vmax.f32 %v1504, 0.0
        %v1817 = vmax.f32 %v1507, 0.0
        %v1818 = vmax.f32 %v1512, 0.0
        %v1819 = vmax.f32 %v1515, 0.0
        %v1820 = vmax.f32 %v1520, 0.0
        %v1821 = vmax.f32 %v1523, 0.0
        %v1822 = vmax.f32 %v1528, 0.0
        %v1823 = vmax.f32 %v1531, 0.0
        %v1824 = vmax.f32 %v1536, 0.0
        %v1825 = vmax.f32 %v1539, 0.0
        %v1826 = vmax.f32 %v1544, 0.0
        %v1827 = vmax.f32 %v1547, 0.0
        %v1828 = vmax.f32 %v1552, 0.0
        %v1829 = vmax.f32 %v1555, 0.0
        %v1830 = vmax.f32 %v1560, 0.0
        %v1831 = vmax.f32 %v1563, 0.0
        %v1832 = vmax.f32 %v1568, 0.0
        %v1833 = vmax.f32 %v1571, 0.0
        %v1834 = vmax.f32 %v1576, 0.0
        %v1835 = vmax.f32 %v1579, 0.0
        %v1836 = vmax.f32 %v1584, 0.0
        %v1837 = vmax.f32 %v1587, 0.0
        %v1838 = vmax.f32 %v1592, 0.0
        %v1839 = vmax.f32 %v1595, 0.0
        %v1840 = vmax.f32 %v1600, 0.0
        %v1841 = vmax.f32 %v1603, 0.0
        %v1842 = vmax.f32 %v1608, 0.0
        %v1843 = vmax.f32 %v1611, 0.0
        %v1844 = vmax.f32 %v1616, 0.0
        %v1845 = vmax.f32 %v1619, 0.0
        %v1846 = vmax.f32 %v1624, 0.0
        %v1847 = vmax.f32 %v1627, 0.0
        %v1848 = vmax.f32 %v1632, 0.0
        %v1849 = vmax.f32 %v1635, 0.0
        %v1850 = vmax.f32 %v1640, 0.0
        %v1851 = vmax.f32 %v1643, 0.0
        %v1852 = vmax.f32 %v1648, 0.0
        %v1853 = vmax.f32 %v1651, 0.0
        %v1854 = vmax.f32 %v1656, 0.0
        %v1855 = vmax.f32 %v1659, 0.0
        %v1856 = vmax.f32 %v1664, 0.0
        %v1857 = vmax.f32 %v1667, 0.0
        %v1858 = vmax.f32 %v1672, 0.0
        %v1859 = vmax.f32 %v1675, 0.0
        %v1860 = vmax.f32 %v1680, 0.0
        %v1861 = vmax.f32 %v1683, 0.0
        %v1862 = vmax.f32 %v1688, 0.0
        %v1863 = vmax.f32 %v1691, 0.0
        %v1864 = vmax.f32 %v1696, 0.0
        %v1865 = vmax.f32 %v1699, 0.0
        %v1866 = vmax.f32 %v1704, 0.0
        %v1867 = vmax.f32 %v1707, 0.0
        %v1868 = vmax.f32 %v1712, 0.0
        %v1869 = vmax.f32 %v1715, 0.0
        %v1870 = vmax.f32 %v1720, 0.0
        %v1871 = vmax.f32 %v1723, 0.0
        %v1872 = vmax.f32 %v1728, 0.0
        %v1873 = vmax.f32 %v1731, 0.0
        %v1874 = vmax.f32 %v1736, 0.0
        %v1875 = vmax.f32 %v1739, 0.0
        %v1876 = vmax.f32 %v1744, 0.0
        %v1877 = vmax.f32 %v1747, 0.0
        %v1878 = vpack.c.bf16 %v1751, %v1750
        %v1879 = vpack.c.bf16 %v1753, %v1752
        %v1880 = vpack.c.bf16 %v1755, %v1754
        %v1881 = vpack.c.bf16 %v1757, %v1756
        %v1882 = vpack.c.bf16 %v1759, %v1758
        %v1883 = vpack.c.bf16 %v1761, %v1760
        %v1884 = vpack.c.bf16 %v1763, %v1762
        %v1885 = vpack.c.bf16 %v1765, %v1764
        %v1886 = vpack.c.bf16 %v1767, %v1766
        %v1887 = vpack.c.bf16 %v1769, %v1768
        %v1888 = vpack.c.bf16 %v1771, %v1770
        %v1889 = vpack.c.bf16 %v1773, %v1772
        %v1890 = vpack.c.bf16 %v1775, %v1774
        %v1891 = vpack.c.bf16 %v1777, %v1776
        %v1892 = vpack.c.bf16 %v1779, %v1778
        %v1893 = vpack.c.bf16 %v1781, %v1780
        %v1894 = vpack.c.bf16 %v1783, %v1782
        %v1895 = vpack.c.bf16 %v1785, %v1784
        %v1896 = vpack.c.bf16 %v1787, %v1786
        %v1897 = vpack.c.bf16 %v1789, %v1788
        %v1898 = vpack.c.bf16 %v1791, %v1790
        %v1899 = vpack.c.bf16 %v1793, %v1792
        %v1900 = vpack.c.bf16 %v1795, %v1794
        %v1901 = vpack.c.bf16 %v1797, %v1796
        %v1902 = vpack.c.bf16 %v1799, %v1798
        %v1903 = vpack.c.bf16 %v1801, %v1800
        %v1904 = vpack.c.bf16 %v1803, %v1802
        %v1905 = vpack.c.bf16 %v1805, %v1804
        %v1906 = vpack.c.bf16 %v1807, %v1806
        %v1907 = vpack.c.bf16 %v1809, %v1808
        %v1908 = vpack.c.bf16 %v1811, %v1810
        %v1909 = vpack.c.bf16 %v1813, %v1812
        %v1910 = vpack.c.bf16 %v1815, %v1814
        %v1911 = vpack.c.bf16 %v1817, %v1816
        %v1912 = vpack.c.bf16 %v1819, %v1818
        %v1913 = vpack.c.bf16 %v1821, %v1820
        %v1914 = vpack.c.bf16 %v1823, %v1822
        %v1915 = vpack.c.bf16 %v1825, %v1824
        %v1916 = vpack.c.bf16 %v1827, %v1826
        %v1917 = vpack.c.bf16 %v1829, %v1828
        %v1918 = vpack.c.bf16 %v1831, %v1830
        %v1919 = vpack.c.bf16 %v1833, %v1832
        %v1920 = vpack.c.bf16 %v1835, %v1834
        %v1921 = vpack.c.bf16 %v1837, %v1836
        %v1922 = vpack.c.bf16 %v1839, %v1838
        %v1923 = vpack.c.bf16 %v1841, %v1840
        %v1924 = vpack.c.bf16 %v1843, %v1842
        %v1925 = vpack.c.bf16 %v1845, %v1844
        %v1926 = vpack.c.bf16 %v1847, %v1846
        %v1927 = vpack.c.bf16 %v1849, %v1848
        %v1928 = vpack.c.bf16 %v1851, %v1850
        %v1929 = vpack.c.bf16 %v1853, %v1852
        %v1930 = vpack.c.bf16 %v1855, %v1854
        %v1931 = vpack.c.bf16 %v1857, %v1856
        %v1932 = vpack.c.bf16 %v1859, %v1858
        %v1933 = vpack.c.bf16 %v1861, %v1860
        %v1934 = vpack.c.bf16 %v1863, %v1862
        %v1935 = vpack.c.bf16 %v1865, %v1864
        %v1936 = vpack.c.bf16 %v1867, %v1866
        %v1937 = vpack.c.bf16 %v1869, %v1868
        %v1938 = vpack.c.bf16 %v1871, %v1870
        %v1939 = vpack.c.bf16 %v1873, %v1872
        %v1940 = vpack.c.bf16 %v1875, %v1874
        %v1941 = vpack.c.bf16 %v1877, %v1876
        %v2006 = vunpack.c.l.b16 %v1878
        %v2007 = vunpack.c.h.b16 %v1878
        %v2008 = vunpack.c.l.b16 %v1879
        %v2009 = vunpack.c.h.b16 %v1879
        %v2010 = vunpack.c.l.b16 %v1880
        %v2011 = vunpack.c.h.b16 %v1880
        %v2012 = vunpack.c.l.b16 %v1881
        %v2013 = vunpack.c.h.b16 %v1881
        %v2014 = vunpack.c.l.b16 %v1882
        %v2015 = vunpack.c.h.b16 %v1882
        %v2016 = vunpack.c.l.b16 %v1883
        %v2017 = vunpack.c.h.b16 %v1883
        %v2018 = vunpack.c.l.b16 %v1884
        %v2019 = vunpack.c.h.b16 %v1884
        %v2020 = vunpack.c.l.b16 %v1885
        %v2021 = vunpack.c.h.b16 %v1885
        %v2022 = vunpack.c.l.b16 %v1886
        %v2023 = vunpack.c.h.b16 %v1886
        %v2024 = vunpack.c.l.b16 %v1887
        %v2025 = vunpack.c.h.b16 %v1887
        %v2026 = vunpack.c.l.b16 %v1888
        %v2027 = vunpack.c.h.b16 %v1888
        %v2028 = vunpack.c.l.b16 %v1889
        %v2029 = vunpack.c.h.b16 %v1889
        %v2030 = vunpack.c.l.b16 %v1890
        %v2031 = vunpack.c.h.b16 %v1890
        %v2032 = vunpack.c.l.b16 %v1891
        %v2033 = vunpack.c.h.b16 %v1891
        %v2034 = vunpack.c.l.b16 %v1892
        %v2035 = vunpack.c.h.b16 %v1892
        %v2036 = vunpack.c.l.b16 %v1893
        %v2037 = vunpack.c.h.b16 %v1893
        %v2038 = vunpack.c.l.b16 %v1894
        %v2039 = vunpack.c.h.b16 %v1894
        %v2040 = vunpack.c.l.b16 %v1895
        %v2041 = vunpack.c.h.b16 %v1895
        %v2042 = vunpack.c.l.b16 %v1896
        %v2043 = vunpack.c.h.b16 %v1896
        %v2044 = vunpack.c.l.b16 %v1897
        %v2045 = vunpack.c.h.b16 %v1897
        %v2046 = vunpack.c.l.b16 %v1898
        %v2047 = vunpack.c.h.b16 %v1898
        %v2048 = vunpack.c.l.b16 %v1899
        %v2049 = vunpack.c.h.b16 %v1899
        %v2050 = vunpack.c.l.b16 %v1900
        %v2051 = vunpack.c.h.b16 %v1900
        %v2052 = vunpack.c.l.b16 %v1901
        %v2053 = vunpack.c.h.b16 %v1901
        %v2054 = vunpack.c.l.b16 %v1902
        %v2055 = vunpack.c.h.b16 %v1902
        %v2056 = vunpack.c.l.b16 %v1903
        %v2057 = vunpack.c.h.b16 %v1903
        %v2058 = vunpack.c.l.b16 %v1904
        %v2059 = vunpack.c.h.b16 %v1904
        %v2060 = vunpack.c.l.b16 %v1905
        %v2061 = vunpack.c.h.b16 %v1905
        %v2062 = vunpack.c.l.b16 %v1906
        %v2063 = vunpack.c.h.b16 %v1906
        %v2064 = vunpack.c.l.b16 %v1907
        %v2065 = vunpack.c.h.b16 %v1907
        %v2066 = vunpack.c.l.b16 %v1908
        %v2067 = vunpack.c.h.b16 %v1908
        %v2068 = vunpack.c.l.b16 %v1909
        %v2069 = vunpack.c.h.b16 %v1909
        %v2070 = vunpack.c.l.b16 %v1910
        %v2071 = vunpack.c.h.b16 %v1910
        %v2072 = vunpack.c.l.b16 %v1911
        %v2073 = vunpack.c.h.b16 %v1911
        %v2074 = vunpack.c.l.b16 %v1912
        %v2075 = vunpack.c.h.b16 %v1912
        %v2076 = vunpack.c.l.b16 %v1913
        %v2077 = vunpack.c.h.b16 %v1913
        %v2078 = vunpack.c.l.b16 %v1914
        %v2079 = vunpack.c.h.b16 %v1914
        %v2080 = vunpack.c.l.b16 %v1915
        %v2081 = vunpack.c.h.b16 %v1915
        %v2082 = vunpack.c.l.b16 %v1916
        %v2083 = vunpack.c.h.b16 %v1916
        %v2084 = vunpack.c.l.b16 %v1917
        %v2085 = vunpack.c.h.b16 %v1917
        %v2086 = vunpack.c.l.b16 %v1918
        %v2087 = vunpack.c.h.b16 %v1918
        %v2088 = vunpack.c.l.b16 %v1919
        %v2089 = vunpack.c.h.b16 %v1919
        %v2090 = vunpack.c.l.b16 %v1920
        %v2091 = vunpack.c.h.b16 %v1920
        %v2092 = vunpack.c.l.b16 %v1921
        %v2093 = vunpack.c.h.b16 %v1921
        %v2094 = vunpack.c.l.b16 %v1922
        %v2095 = vunpack.c.h.b16 %v1922
        %v2096 = vunpack.c.l.b16 %v1923
        %v2097 = vunpack.c.h.b16 %v1923
        %v2098 = vunpack.c.l.b16 %v1924
        %v2099 = vunpack.c.h.b16 %v1924
        %v2100 = vunpack.c.l.b16 %v1925
        %v2101 = vunpack.c.h.b16 %v1925
        %v2102 = vunpack.c.l.b16 %v1926
        %v2103 = vunpack.c.h.b16 %v1926
        %v2104 = vunpack.c.l.b16 %v1927
        %v2105 = vunpack.c.h.b16 %v1927
        %v2106 = vunpack.c.l.b16 %v1928
        %v2107 = vunpack.c.h.b16 %v1928
        %v2108 = vunpack.c.l.b16 %v1929
        %v2109 = vunpack.c.h.b16 %v1929
        %v2110 = vunpack.c.l.b16 %v1930
        %v2111 = vunpack.c.h.b16 %v1930
        %v2112 = vunpack.c.l.b16 %v1931
        %v2113 = vunpack.c.h.b16 %v1931
        %v2114 = vunpack.c.l.b16 %v1932
        %v2115 = vunpack.c.h.b16 %v1932
        %v2116 = vunpack.c.l.b16 %v1933
        %v2117 = vunpack.c.h.b16 %v1933
        %v2118 = vunpack.c.l.b16 %v1934
        %v2119 = vunpack.c.h.b16 %v1934
        %v2120 = vunpack.c.l.b16 %v1935
        %v2121 = vunpack.c.h.b16 %v1935
        %v2122 = vunpack.c.l.b16 %v1936
        %v2123 = vunpack.c.h.b16 %v1936
        %v2124 = vunpack.c.l.b16 %v1937
        %v2125 = vunpack.c.h.b16 %v1937
        %v2126 = vunpack.c.l.b16 %v1938
        %v2127 = vunpack.c.h.b16 %v1938
        %v2128 = vunpack.c.l.b16 %v1939
        %v2129 = vunpack.c.h.b16 %v1939
        %v2130 = vunpack.c.l.b16 %v1940
        %v2131 = vunpack.c.h.b16 %v1940
        %v2132 = vunpack.c.l.b16 %v1941
        %v2133 = vunpack.c.h.b16 %v1941
        %v2134 = vpack.c.b16 %v2006, %v2006
        %v2135 = vpack.c.b16 %v2007, %v2007
        %v2136 = vpack.c.b16 %v2008, %v2008
        %v2137 = vpack.c.b16 %v2009, %v2009
        %v2138 = vpack.c.b16 %v2010, %v2010
        %v2139 = vpack.c.b16 %v2011, %v2011
        %v2140 = vpack.c.b16 %v2012, %v2012
        %v2141 = vpack.c.b16 %v2013, %v2013
        %v2142 = vpack.c.b16 %v2014, %v2014
        %v2143 = vpack.c.b16 %v2015, %v2015
        %v2144 = vpack.c.b16 %v2016, %v2016
        %v2145 = vpack.c.b16 %v2017, %v2017
        %v2146 = vpack.c.b16 %v2018, %v2018
        %v2147 = vpack.c.b16 %v2019, %v2019
        %v2148 = vpack.c.b16 %v2020, %v2020
        %v2149 = vpack.c.b16 %v2021, %v2021
        %v2150 = vpack.c.b16 %v2022, %v2022
        %v2151 = vpack.c.b16 %v2023, %v2023
        %v2152 = vpack.c.b16 %v2024, %v2024
        %v2153 = vpack.c.b16 %v2025, %v2025
        %v2154 = vpack.c.b16 %v2026, %v2026
        %v2155 = vpack.c.b16 %v2027, %v2027
        %v2156 = vpack.c.b16 %v2028, %v2028
        %v2157 = vpack.c.b16 %v2029, %v2029
        %v2158 = vpack.c.b16 %v2030, %v2030
        %v2159 = vpack.c.b16 %v2031, %v2031
        %v2160 = vpack.c.b16 %v2032, %v2032
        %v2161 = vpack.c.b16 %v2033, %v2033
        %v2162 = vpack.c.b16 %v2034, %v2034
        %v2163 = vpack.c.b16 %v2035, %v2035
        %v2164 = vpack.c.b16 %v2036, %v2036
        %v2165 = vpack.c.b16 %v2037, %v2037
        %v2166 = vpack.c.b16 %v2038, %v2038
        %v2167 = vpack.c.b16 %v2039, %v2039
        %v2168 = vpack.c.b16 %v2040, %v2040
        %v2169 = vpack.c.b16 %v2041, %v2041
        %v2170 = vpack.c.b16 %v2042, %v2042
        %v2171 = vpack.c.b16 %v2043, %v2043
        %v2172 = vpack.c.b16 %v2044, %v2044
        %v2173 = vpack.c.b16 %v2045, %v2045
        %v2174 = vpack.c.b16 %v2046, %v2046
        %v2175 = vpack.c.b16 %v2047, %v2047
        %v2176 = vpack.c.b16 %v2048, %v2048
        %v2177 = vpack.c.b16 %v2049, %v2049
        %v2178 = vpack.c.b16 %v2050, %v2050
        %v2179 = vpack.c.b16 %v2051, %v2051
        %v2180 = vpack.c.b16 %v2052, %v2052
        %v2181 = vpack.c.b16 %v2053, %v2053
        %v2182 = vpack.c.b16 %v2054, %v2054
        %v2183 = vpack.c.b16 %v2055, %v2055
        %v2184 = vpack.c.b16 %v2056, %v2056
        %v2185 = vpack.c.b16 %v2057, %v2057
        %v2186 = vpack.c.b16 %v2058, %v2058
        %v2187 = vpack.c.b16 %v2059, %v2059
        %v2188 = vpack.c.b16 %v2060, %v2060
        %v2189 = vpack.c.b16 %v2061, %v2061
        %v2190 = vpack.c.b16 %v2062, %v2062
        %v2191 = vpack.c.b16 %v2063, %v2063
        %v2192 = vpack.c.b16 %v2064, %v2064
        %v2193 = vpack.c.b16 %v2065, %v2065
        %v2194 = vpack.c.b16 %v2066, %v2066
        %v2195 = vpack.c.b16 %v2067, %v2067
        %v2196 = vpack.c.b16 %v2068, %v2068
        %v2197 = vpack.c.b16 %v2069, %v2069
        %v2198 = vpack.c.b16 %v2070, %v2070
        %v2199 = vpack.c.b16 %v2071, %v2071
        %v2200 = vpack.c.b16 %v2072, %v2072
        %v2201 = vpack.c.b16 %v2073, %v2073
        %v2202 = vpack.c.b16 %v2074, %v2074
        %v2203 = vpack.c.b16 %v2075, %v2075
        %v2204 = vpack.c.b16 %v2076, %v2076
        %v2205 = vpack.c.b16 %v2077, %v2077
        %v2206 = vpack.c.b16 %v2078, %v2078
        %v2207 = vpack.c.b16 %v2079, %v2079
        %v2208 = vpack.c.b16 %v2080, %v2080
        %v2209 = vpack.c.b16 %v2081, %v2081
        %v2210 = vpack.c.b16 %v2082, %v2082
        %v2211 = vpack.c.b16 %v2083, %v2083
        %v2212 = vpack.c.b16 %v2084, %v2084
        %v2213 = vpack.c.b16 %v2085, %v2085
        %v2214 = vpack.c.b16 %v2086, %v2086
        %v2215 = vpack.c.b16 %v2087, %v2087
        %v2216 = vpack.c.b16 %v2088, %v2088
        %v2217 = vpack.c.b16 %v2089, %v2089
        %v2218 = vpack.c.b16 %v2090, %v2090
        %v2219 = vpack.c.b16 %v2091, %v2091
        %v2220 = vpack.c.b16 %v2092, %v2092
        %v2221 = vpack.c.b16 %v2093, %v2093
        %v2222 = vpack.c.b16 %v2094, %v2094
        %v2223 = vpack.c.b16 %v2095, %v2095
        %v2224 = vpack.c.b16 %v2096, %v2096
        %v2225 = vpack.c.b16 %v2097, %v2097
        %v2226 = vpack.c.b16 %v2098, %v2098
        %v2227 = vpack.c.b16 %v2099, %v2099
        %v2228 = vpack.c.b16 %v2100, %v2100
        %v2229 = vpack.c.b16 %v2101, %v2101
        %v2230 = vpack.c.b16 %v2102, %v2102
        %v2231 = vpack.c.b16 %v2103, %v2103
        %v2232 = vpack.c.b16 %v2104, %v2104
        %v2233 = vpack.c.b16 %v2105, %v2105
        %v2234 = vpack.c.b16 %v2106, %v2106
        %v2235 = vpack.c.b16 %v2107, %v2107
        %v2236 = vpack.c.b16 %v2108, %v2108
        %v2237 = vpack.c.b16 %v2109, %v2109
        %v2238 = vpack.c.b16 %v2110, %v2110
        %v2239 = vpack.c.b16 %v2111, %v2111
        %v2240 = vpack.c.b16 %v2112, %v2112
        %v2241 = vpack.c.b16 %v2113, %v2113
        %v2242 = vpack.c.b16 %v2114, %v2114
        %v2243 = vpack.c.b16 %v2115, %v2115
        %v2244 = vpack.c.b16 %v2116, %v2116
        %v2245 = vpack.c.b16 %v2117, %v2117
        %v2246 = vpack.c.b16 %v2118, %v2118
        %v2247 = vpack.c.b16 %v2119, %v2119
        %v2248 = vpack.c.b16 %v2120, %v2120
        %v2249 = vpack.c.b16 %v2121, %v2121
        %v2250 = vpack.c.b16 %v2122, %v2122
        %v2251 = vpack.c.b16 %v2123, %v2123
        %v2252 = vpack.c.b16 %v2124, %v2124
        %v2253 = vpack.c.b16 %v2125, %v2125
        %v2254 = vpack.c.b16 %v2126, %v2126
        %v2255 = vpack.c.b16 %v2127, %v2127
        %v2256 = vpack.c.b16 %v2128, %v2128
        %v2257 = vpack.c.b16 %v2129, %v2129
        %v2258 = vpack.c.b16 %v2130, %v2130
        %v2259 = vpack.c.b16 %v2131, %v2131
        %v2260 = vpack.c.b16 %v2132, %v2132
        %v2261 = vpack.c.b16 %v2133, %v2133
        %2390 = vst [vmem:[%s204] sm:$0xf] %v2134
        %2391 = vst [vmem:[%s204 + $0x4] sm:$0xf] %v2135
        %2392 = vst [vmem:[%s204 + $0x8] sm:$0xf] %v2136
        %2393 = vst [vmem:[%s204 + $0xc] sm:$0xf] %v2137
        %2394 = vst [vmem:[%s204 + $0x10] sm:$0xf] %v2138
        %2395 = vst [vmem:[%s204 + $0x14] sm:$0xf] %v2139
        %2396 = vst [vmem:[%s204 + $0x18] sm:$0xf] %v2140
        %2397 = vst [vmem:[%s204 + $0x1c] sm:$0xf] %v2141
        %2398 = vst [vmem:[%s204 + $0x20] sm:$0xf] %v2142
        %2399 = vst [vmem:[%s204 + $0x24] sm:$0xf] %v2143
        %2400 = vst [vmem:[%s204 + $0x28] sm:$0xf] %v2144
        %2401 = vst [vmem:[%s204 + $0x2c] sm:$0xf] %v2145
        %2402 = vst [vmem:[%s204 + $0x30] sm:$0xf] %v2146
        %2403 = vst [vmem:[%s204 + $0x34] sm:$0xf] %v2147
        %2404 = vst [vmem:[%s204 + $0x38] sm:$0xf] %v2148
        %2405 = vst [vmem:[%s204 + $0x3c] sm:$0xf] %v2149
        %2406 = vst [vmem:[%s204 + $0x40] sm:$0xf] %v2150
        %2407 = vst [vmem:[%s204 + $0x44] sm:$0xf] %v2151
        %2408 = vst [vmem:[%s204 + $0x48] sm:$0xf] %v2152
        %2409 = vst [vmem:[%s204 + $0x4c] sm:$0xf] %v2153
        %2410 = vst [vmem:[%s204 + $0x50] sm:$0xf] %v2154
        %2411 = vst [vmem:[%s204 + $0x54] sm:$0xf] %v2155
        %2412 = vst [vmem:[%s204 + $0x58] sm:$0xf] %v2156
        %2413 = vst [vmem:[%s204 + $0x5c] sm:$0xf] %v2157
        %2414 = vst [vmem:[%s204 + $0x60] sm:$0xf] %v2158
        %2415 = vst [vmem:[%s204 + $0x64] sm:$0xf] %v2159
        %2416 = vst [vmem:[%s204 + $0x68] sm:$0xf] %v2160
        %2417 = vst [vmem:[%s204 + $0x6c] sm:$0xf] %v2161
        %2418 = vst [vmem:[%s204 + $0x70] sm:$0xf] %v2162
        %2419 = vst [vmem:[%s204 + $0x74] sm:$0xf] %v2163
        %2420 = vst [vmem:[%s204 + $0x78] sm:$0xf] %v2164
        %2421 = vst [vmem:[%s204 + $0x7c] sm:$0xf] %v2165
        %2422 = vst [vmem:[%s204 + $0x80] sm:$0xf] %v2166
        %2423 = vst [vmem:[%s204 + $0x84] sm:$0xf] %v2167
        %2424 = vst [vmem:[%s204 + $0x88] sm:$0xf] %v2168
        %2425 = vst [vmem:[%s204 + $0x8c] sm:$0xf] %v2169
        %2426 = vst [vmem:[%s204 + $0x90] sm:$0xf] %v2170
        %2427 = vst [vmem:[%s204 + $0x94] sm:$0xf] %v2171
        %2428 = vst [vmem:[%s204 + $0x98] sm:$0xf] %v2172
        %2429 = vst [vmem:[%s204 + $0x9c] sm:$0xf] %v2173
        %2430 = vst [vmem:[%s204 + $0xa0] sm:$0xf] %v2174
        %2431 = vst [vmem:[%s204 + $0xa4] sm:$0xf] %v2175
        %2432 = vst [vmem:[%s204 + $0xa8] sm:$0xf] %v2176
        %2433 = vst [vmem:[%s204 + $0xac] sm:$0xf] %v2177
        %2434 = vst [vmem:[%s204 + $0xb0] sm:$0xf] %v2178
        %2435 = vst [vmem:[%s204 + $0xb4] sm:$0xf] %v2179
        %2436 = vst [vmem:[%s204 + $0xb8] sm:$0xf] %v2180
        %2437 = vst [vmem:[%s204 + $0xbc] sm:$0xf] %v2181
        %2438 = vst [vmem:[%s204 + $0xc0] sm:$0xf] %v2182
        %2439 = vst [vmem:[%s204 + $0xc4] sm:$0xf] %v2183
        %2440 = vst [vmem:[%s204 + $0xc8] sm:$0xf] %v2184
        %2441 = vst [vmem:[%s204 + $0xcc] sm:$0xf] %v2185
        %2442 = vst [vmem:[%s204 + $0xd0] sm:$0xf] %v2186
        %2443 = vst [vmem:[%s204 + $0xd4] sm:$0xf] %v2187
        %2444 = vst [vmem:[%s204 + $0xd8] sm:$0xf] %v2188
        %2445 = vst [vmem:[%s204 + $0xdc] sm:$0xf] %v2189
        %2446 = vst [vmem:[%s204 + $0xe0] sm:$0xf] %v2190
        %2447 = vst [vmem:[%s204 + $0xe4] sm:$0xf] %v2191
        %2448 = vst [vmem:[%s204 + $0xe8] sm:$0xf] %v2192
        %2449 = vst [vmem:[%s204 + $0xec] sm:$0xf] %v2193
        %2450 = vst [vmem:[%s204 + $0xf0] sm:$0xf] %v2194
        %2451 = vst [vmem:[%s204 + $0xf4] sm:$0xf] %v2195
        %2452 = vst [vmem:[%s204 + $0xf8] sm:$0xf] %v2196
        %2453 = vst [vmem:[%s204 + $0xfc] sm:$0xf] %v2197
        %2454 = vst [vmem:[%s204 + $0x100] sm:$0xf] %v2198
        %2455 = vst [vmem:[%s204 + $0x104] sm:$0xf] %v2199
        %2456 = vst [vmem:[%s204 + $0x108] sm:$0xf] %v2200
        %2457 = vst [vmem:[%s204 + $0x10c] sm:$0xf] %v2201
        %2458 = vst [vmem:[%s204 + $0x110] sm:$0xf] %v2202
        %2459 = vst [vmem:[%s204 + $0x114] sm:$0xf] %v2203
        %2460 = vst [vmem:[%s204 + $0x118] sm:$0xf] %v2204
        %2461 = vst [vmem:[%s204 + $0x11c] sm:$0xf] %v2205
        %2462 = vst [vmem:[%s204 + $0x120] sm:$0xf] %v2206
        %2463 = vst [vmem:[%s204 + $0x124] sm:$0xf] %v2207
        %2464 = vst [vmem:[%s204 + $0x128] sm:$0xf] %v2208
        %2465 = vst [vmem:[%s204 + $0x12c] sm:$0xf] %v2209
        %2466 = vst [vmem:[%s204 + $0x130] sm:$0xf] %v2210
        %2467 = vst [vmem:[%s204 + $0x134] sm:$0xf] %v2211
        %2468 = vst [vmem:[%s204 + $0x138] sm:$0xf] %v2212
        %2469 = vst [vmem:[%s204 + $0x13c] sm:$0xf] %v2213
        %2470 = vst [vmem:[%s204 + $0x140] sm:$0xf] %v2214
        %2471 = vst [vmem:[%s204 + $0x144] sm:$0xf] %v2215
        %2472 = vst [vmem:[%s204 + $0x148] sm:$0xf] %v2216
        %2473 = vst [vmem:[%s204 + $0x14c] sm:$0xf] %v2217
        %2474 = vst [vmem:[%s204 + $0x150] sm:$0xf] %v2218
        %2475 = vst [vmem:[%s204 + $0x154] sm:$0xf] %v2219
        %2476 = vst [vmem:[%s204 + $0x158] sm:$0xf] %v2220
        %2477 = vst [vmem:[%s204 + $0x15c] sm:$0xf] %v2221
        %2478 = vst [vmem:[%s204 + $0x160] sm:$0xf] %v2222
        %2479 = vst [vmem:[%s204 + $0x164] sm:$0xf] %v2223
        %2480 = vst [vmem:[%s204 + $0x168] sm:$0xf] %v2224
        %2481 = vst [vmem:[%s204 + $0x16c] sm:$0xf] %v2225
        %2482 = vst [vmem:[%s204 + $0x170] sm:$0xf] %v2226
        %2483 = vst [vmem:[%s204 + $0x174] sm:$0xf] %v2227
        %2484 = vst [vmem:[%s204 + $0x178] sm:$0xf] %v2228
        %2485 = vst [vmem:[%s204 + $0x17c] sm:$0xf] %v2229
        %2486 = vst [vmem:[%s204 + $0x180] sm:$0xf] %v2230
        %2487 = vst [vmem:[%s204 + $0x184] sm:$0xf] %v2231
        %2488 = vst [vmem:[%s204 + $0x188] sm:$0xf] %v2232
        %2489 = vst [vmem:[%s204 + $0x18c] sm:$0xf] %v2233
        %2490 = vst [vmem:[%s204 + $0x190] sm:$0xf] %v2234
        %2491 = vst [vmem:[%s204 + $0x194] sm:$0xf] %v2235
        %2492 = vst [vmem:[%s204 + $0x198] sm:$0xf] %v2236
        %2493 = vst [vmem:[%s204 + $0x19c] sm:$0xf] %v2237
        %2494 = vst [vmem:[%s204 + $0x1a0] sm:$0xf] %v2238
        %2495 = vst [vmem:[%s204 + $0x1a4] sm:$0xf] %v2239
        %2496 = vst [vmem:[%s204 + $0x1a8] sm:$0xf] %v2240
        %2497 = vst [vmem:[%s204 + $0x1ac] sm:$0xf] %v2241
        %2498 = vst [vmem:[%s204 + $0x1b0] sm:$0xf] %v2242
        %2499 = vst [vmem:[%s204 + $0x1b4] sm:$0xf] %v2243
        %2500 = vst [vmem:[%s204 + $0x1b8] sm:$0xf] %v2244
        %2501 = vst [vmem:[%s204 + $0x1bc] sm:$0xf] %v2245
        %2502 = vst [vmem:[%s204 + $0x1c0] sm:$0xf] %v2246
        %2503 = vst [vmem:[%s204 + $0x1c4] sm:$0xf] %v2247
        %2504 = vst [vmem:[%s204 + $0x1c8] sm:$0xf] %v2248
        %2505 = vst [vmem:[%s204 + $0x1cc] sm:$0xf] %v2249
        %2506 = vst [vmem:[%s204 + $0x1d0] sm:$0xf] %v2250
        %2507 = vst [vmem:[%s204 + $0x1d4] sm:$0xf] %v2251
        %2508 = vst [vmem:[%s204 + $0x1d8] sm:$0xf] %v2252
        %2509 = vst [vmem:[%s204 + $0x1dc] sm:$0xf] %v2253
        %2510 = vst [vmem:[%s204 + $0x1e0] sm:$0xf] %v2254
        %2511 = vst [vmem:[%s204 + $0x1e4] sm:$0xf] %v2255
        %2512 = vst [vmem:[%s204 + $0x1e8] sm:$0xf] %v2256
        %2513 = vst [vmem:[%s204 + $0x1ec] sm:$0xf] %v2257
        %2514 = vst [vmem:[%s204 + $0x1f0] sm:$0xf] %v2258
        %2515 = vst [vmem:[%s204 + $0x1f4] sm:$0xf] %v2259
        %2516 = vst [vmem:[%s204 + $0x1f8] sm:$0xf] %v2260
        %2517 = vst [vmem:[%s204 + $0x1fc] sm:$0xf] %v2261
        %s2518 = sand.u32 %s117, 1
        %s2519 = scalar_lea.sflag [#allocation3], %s2518
        %s2520 = sand.u32 %s117, 1
        %s2521 = smul.addr %s2520, 512
        %s2522 = scalar_lea.vmem [#allocation2], %s2521
        // Predicated region
        $region33: #{tpu_custom_call.1} parent=31 // pred_check
          %p2523 = pneg %p127
        $region34: #{tpu_custom_call.1} parent=31 // pred_check_branch
          %2525 = sbr.rel (%p2523) target = $region36
        $region35: #{tpu_custom_call.1} parent=31 // pred_region
          %s2526 = smul.u32 128, %s21
          %s2528 = ssub.s32 8192, 8192
          %2529 = vsyncadd %s2519, %s2528
          %s2530 = sadd.s32 %s22, %s2526
          %s2531 = smul.addr %s2530, 64
          %s2532 = scalar_lea.hbm %s3, %s2531
          %s2533 = sshll.u32 %s2522, 4
          %s2534 = int_to_ptr.vmem [resolvable:$true] %s2533
          %2539 = dma.vmem_to_hbm [thread:$0]  %s2534, 8192, %s2532, %s2519, 64, 64, 4
        $region36: #{tpu_custom_call.1} parent=31 // pred_fallthru
          _
      $region32: #{tpu_custom_call.1} parent=5 // pred_fallthru
        _
      %p2540 = scmp.le.s32.totalorder 2, %s12
      // Predicated region
      $region37: #{tpu_custom_call.1} parent=5 // pred_check
        %p2541 = pneg %p2540
      $region38: #{tpu_custom_call.1} parent=5 // pred_check_branch
        %2543 = sbr.rel (%p2541) target = $region40
      $region39: #{tpu_custom_call.1} parent=5 // pred_region
        %s2544 = ssub.s32 %s12, 2
        // Predicated region
        $region41: #{tpu_custom_call.1} parent=39 // pred_check
          %p2545 = pneg %p133
        $region42: #{tpu_custom_call.1} parent=39 // pred_check_branch
          %2547 = sbr.rel (%p2545) target = $region44
        $region43: #{tpu_custom_call.1} parent=39 // pred_region
          %s2548 = sand.u32 %s118, 1
          %s2549 = scalar_lea.sflag [#allocation3], %s2548
          %s2550 = sand.u32 %s118, 1
          %s2551 = smul.addr %s2550, 512
          %s2552 = scalar_lea.vmem [#allocation2], %s2551
          %2553 = dma.done %s2549, 8192
        $region44: #{tpu_custom_call.1} parent=39 // pred_fallthru
          _
      $region40: #{tpu_custom_call.1} parent=5 // pred_fallthru
        _
    $region6: #{tpu_custom_call.1} parent=1 // loop_footer
      %s16 = sadd.s32 1, %s12
    $region7: #{tpu_custom_call.1} parent=1 // loop_footer_branch
      %11 = sbr.rel target = $region3
    $region8: #{tpu_custom_call.1} parent=1 // loop_exit
      _
    %2554 = vsyncpa [#allocation3], 1
    %s2555 = scalar_lea.sflag [#allocation3], 1
    %2556 = vsyncpa %s2555, 1

</llo_original>
